<compile_context>
chip_gen: v5e
topology: v5e:2x2
jax: 0.10.0
libtpu: 0.0.40
codegen_flags: <defaults>
</compile_context>

<pallas_src>
import functools

import jax
import jax.numpy as jnp
from jax import lax
from jax.experimental import pallas as pl
from jax.experimental.pallas import tpu as pltpu


# ----------------------------------------------------------------------------
# Pallas kernel: fused 3x3 conv + BN shift + ReLU for one (row-block, F) tile
# ----------------------------------------------------------------------------
def _conv3x3_bn_relu_kernel(x_ref, w_ref, shift_ref, o_ref, *, th, wo, cin, pack):
    # x_ref:     (th+2, Wp, cin)  bf16  padded-input row window (2-row halo)
    # w_ref:     (9*cin, TF)      bf16  BN-scale-folded weights, tap-major K
    # shift_ref: (1, TF)          f32   folded bias / BN shift
    # o_ref:     (th, wo, TF)     bf16  output tile (no junk columns)
    m = th * wo
    if pack:
        # Small Cin: in-VMEM im2col -> single MXU matmul with K = 9*cin.
        taps = [
            x_ref[dy:dy + th, dx:dx + wo, :].reshape(m, cin)
            for dy in range(3) for dx in range(3)
        ]
        lhs = jnp.concatenate(taps, axis=-1)                 # (m, 9*cin) bf16
        acc = jnp.dot(lhs, w_ref[...], preferred_element_type=jnp.float32)
    else:
        # Large Cin: 9 shifted matmuls, f32 accumulation (K decomposed per tap).
        acc = None
        for t in range(9):
            dy, dx = divmod(t, 3)
            lhs = x_ref[dy:dy + th, dx:dx + wo, :].reshape(m, cin)
            part = jnp.dot(lhs, w_ref[pl.ds(t * cin, cin), :],
                           preferred_element_type=jnp.float32)
            acc = part if acc is None else acc + part
    y = jnp.maximum(acc + shift_ref[...], 0.0)               # f32 epilogue
    o_ref[...] = y.astype(o_ref.dtype).reshape(th, wo, -1)


def _pick_row_tile(h, w, f_tile, acc_budget_bytes=2 << 20):
    """Largest divisor of H whose f32 accumulator tile fits the budget; split
    once more when possible so the grid has >= 2 row blocks (megacore)."""
    th = max(1, min(h, acc_budget_bytes // max(1, w * f_tile * 4)))
    while h % th:
        th -= 1
    if th == h and h % 2 == 0 and h >= 16:
        th = h // 2
    return max(th, 1)


def fused_conv3x3_bn_relu(x_nhwc, w_folded, shift, *, f_tile=None, row_tile=None):
    """y = relu(conv3x3(x, w_folded, pad=1) + shift).  NHWC in -> NHWC bf16 out."""
    N, H, W, Cin = x_nhwc.shape
    Cout = w_folded.shape[-1]
    Wp = W + 2

    # Cout tiling: keep f_tile a multiple of 256 when possible, never < Cout/128.
    if f_tile is None:
        f_tile = 256 if (Cout % 256 == 0 and Cout > 256) else Cout
    assert Cout % f_tile == 0, (Cout, f_tile)
    n_f = Cout // f_tile

    th = row_tile if row_tile is not None else _pick_row_tile(H, W, f_tile)
    assert H % th == 0, (H, th)
    n_h = H // th

    # Pad once in bf16 (1 px halo on H and W), then materialise overlapping
    # (th+2)-row windows so a plain BlockSpec streams one window per grid step.
    xpad = jnp.pad(x_nhwc.astype(jnp.bfloat16), ((0, 0), (1, 1), (1, 1), (0, 0)))
    xwin = jnp.stack([xpad[:, i * th:i * th + th + 2] for i in range(n_h)], axis=1)
    # xwin: (N, n_h, th+2, Wp, Cin)

    w9 = w_folded.reshape(9 * Cin, Cout).astype(jnp.bfloat16)   # tap-major K
    shift2 = shift.reshape(1, Cout).astype(jnp.float32)

    pack = Cin < 128
    kern = functools.partial(_conv3x3_bn_relu_kernel,
                             th=th, wo=W, cin=Cin, pack=pack)

    # Grid: Cout tile outermost -> the (9*Cin, f_tile) weight block stays
    # VMEM-resident across all (batch, row-block) steps.
    y = pl.pallas_call(
        kern,
        out_shape=jax.ShapeDtypeStruct((N, H, W, Cout), jnp.bfloat16),
        grid_spec=pltpu.PrefetchScalarGridSpec(
            num_scalar_prefetch=0,
            grid=(n_f, N, n_h),
            in_specs=[
                pl.BlockSpec((None, None, th + 2, Wp, Cin),
                             lambda f, n, h: (n, h, 0, 0, 0)),
                pl.BlockSpec((9 * Cin, f_tile), lambda f, n, h: (0, f)),
                pl.BlockSpec((1, f_tile), lambda f, n, h: (0, f)),
            ],
            out_specs=pl.BlockSpec((None, th, W, f_tile),
                                   lambda f, n, h: (n, h, 0, f)),
        ),
        compiler_params=pltpu.CompilerParams(
            dimension_semantics=("parallel", "parallel", "parallel"),
            vmem_limit_bytes=32 * 1024 * 1024,
        ),
    )(xwin, w9, shift2)
    return y  # (N, H, W, Cout) bf16


# ----------------------------------------------------------------------------
# conv_block forward (PyTorch semantics, eval mode)
# ----------------------------------------------------------------------------
def conv_block_forward(x_nchw, params, eps=1e-5):
    """Conv2d(3x3,pad=1) + BatchNorm2d(eval) + ReLU (+ identity Dropout2d)."""
    # NCHW -> NHWC with the bf16 cast fused into the same pass.
    # TODO(synk): a real NHWC UNet++ would keep NHWC end-to-end and consume the
    # kernel's bf16 output directly (dropping both transposes and the f32 cast).
    x = jnp.transpose(x_nchw, (0, 2, 3, 1)).astype(jnp.bfloat16)
    inv_std = lax.rsqrt(params["var"] + eps)
    scale = params["gamma"] * inv_std                            # (Cout,)
    shift = params["beta"] + scale * (params["b"] - params["mean"])
    w_folded = params["w"] * scale                               # fold BN into W
    y = fused_conv3x3_bn_relu(x, w_folded, shift)                # NHWC bf16
    # Dropout2d is the identity in eval mode.
    return jnp.transpose(y, (0, 3, 1, 2)).astype(jnp.float32)    # -> NCHW f32


# ----------------------------------------------------------------------------
# Deterministic synthetic parameters + pure-JAX reference
# ----------------------------------------------------------------------------
def init_conv_block_params(key, cin, cout):
    k = jax.random.split(key, 6)
    return {
        "w": jax.random.normal(k[0], (3, 3, cin, cout), jnp.float32)
        / jnp.sqrt(9.0 * cin),
        "b": jax.random.normal(k[1], (cout,), jnp.float32) * 0.01,
        "gamma": jax.random.uniform(k[2], (cout,), jnp.float32, 0.5, 1.5),
        "beta": jax.random.normal(k[3], (cout,), jnp.float32) * 0.1,
        "mean": jax.random.normal(k[4], (cout,), jnp.float32) * 0.1,
        "var": jax.random.uniform(k[5], (cout,), jnp.float32, 0.5, 1.5),
    }


def conv_block_reference(x_nchw, params, eps=1e-5):
    x = jnp.transpose(x_nchw, (0, 2, 3, 1)).astype(jnp.float32)
    y = lax.conv_general_dilated(
        x, params["w"], window_strides=(1, 1), padding=((1, 1), (1, 1)),
        dimension_numbers=("NHWC", "HWIO", "NHWC"))
    y = y + params["b"]
    y = (y - params["mean"]) / jnp.sqrt(params["var"] + eps)
    y = y * params["gamma"] + params["beta"]
    y = jnp.maximum(y, 0.0)
    return jnp.transpose(y, (0, 3, 1, 2))


# ----------------------------------------------------------------------------
# Main
# ----------------------------------------------------------------------------
if __name__ == "__main__":
    key = jax.random.PRNGKey(0)
    kp, kx = jax.random.split(key)

    N, Cin, H, W, Cout = 2, 4, 16, 16, 128
    params = init_conv_block_params(kp, Cin, Cout)
    x = jax.random.normal(kx, (N, Cin, H, W), jnp.float32)   # NCHW like PyTorch

    fwd = jax.jit(conv_block_forward)
    out = jax.block_until_ready(fwd(x, params))

    assert out.shape == (N, Cout, H, W), out.shape
    assert bool(jnp.all(jnp.isfinite(out))), "non-finite output"

    ref = conv_block_reference(x, params)
    err = float(jnp.max(jnp.abs(out - ref)))
    assert err < 1.5e-1, f"max abs error vs f32 reference = {err}"

    print("KERNEL_OK")
</pallas_src>

<mosaic_0001>
module attributes {stable_mosaic.version = 11 : i64} {
  func.func @_conv3x3_bn_relu_kernel(%arg0: i32, %arg1: i32, %arg2: i32, %arg3: memref<1x1x10x18x4xbf16, #tpu.memory_space<vmem>>, %arg4: memref<36x128xbf16, #tpu.memory_space<vmem>>, %arg5: memref<1x128xf32, #tpu.memory_space<vmem>>, %arg6: memref<1x8x16x128xbf16, #tpu.memory_space<vmem>>) attributes {dimension_semantics = [#tpu.dimension_semantics<parallel>, #tpu.dimension_semantics<parallel>, #tpu.dimension_semantics<parallel>], iteration_bounds = array<i64: 1, 2, 2>, scalar_prefetch = 0 : i64, scratch_operands = 0 : i64, tpu.core_type = #tpu.core_type<tc>, window_params = [{transform_indices = @transform_0, window_bounds = array<i64: 1, 1, 10, 18, 4>}, {transform_indices = @transform_1, window_bounds = array<i64: 36, 128>}, {transform_indices = @transform_2, window_bounds = array<i64: 1, 128>}, {transform_indices = @transform_3, window_bounds = array<i64: 1, 8, 16, 128>}]} {
    %c0 = arith.constant 0 : index
    %c0_0 = arith.constant 0 : index
    %c0_1 = arith.constant 0 : index
    %c0_2 = arith.constant 0 : index
    %c0_3 = arith.constant 0 : index
    %0 = vector.load %arg3[%c0, %c0_0, %c0_1, %c0_2, %c0_3] : memref<1x1x10x18x4xbf16, #tpu.memory_space<vmem>>, vector<1x1x8x16x4xbf16>
    %1 = vector.shape_cast %0 : vector<1x1x8x16x4xbf16> to vector<8x16x4xbf16>
    %2 = vector.shape_cast %1 : vector<8x16x4xbf16> to vector<128x4xbf16>
    %c0_4 = arith.constant 0 : index
    %c0_5 = arith.constant 0 : index
    %c0_6 = arith.constant 0 : index
    %c1 = arith.constant 1 : index
    %c0_7 = arith.constant 0 : index
    %3 = vector.load %arg3[%c0_4, %c0_5, %c0_6, %c1, %c0_7] : memref<1x1x10x18x4xbf16, #tpu.memory_space<vmem>>, vector<1x1x8x16x4xbf16>
    %4 = vector.shape_cast %3 : vector<1x1x8x16x4xbf16> to vector<8x16x4xbf16>
    %5 = vector.shape_cast %4 : vector<8x16x4xbf16> to vector<128x4xbf16>
    %c0_8 = arith.constant 0 : index
    %c0_9 = arith.constant 0 : index
    %c0_10 = arith.constant 0 : index
    %c2 = arith.constant 2 : index
    %c0_11 = arith.constant 0 : index
    %6 = vector.load %arg3[%c0_8, %c0_9, %c0_10, %c2, %c0_11] : memref<1x1x10x18x4xbf16, #tpu.memory_space<vmem>>, vector<1x1x8x16x4xbf16>
    %7 = vector.shape_cast %6 : vector<1x1x8x16x4xbf16> to vector<8x16x4xbf16>
    %8 = vector.shape_cast %7 : vector<8x16x4xbf16> to vector<128x4xbf16>
    %c0_12 = arith.constant 0 : index
    %c0_13 = arith.constant 0 : index
    %c1_14 = arith.constant 1 : index
    %c0_15 = arith.constant 0 : index
    %c0_16 = arith.constant 0 : index
    %9 = vector.load %arg3[%c0_12, %c0_13, %c1_14, %c0_15, %c0_16] : memref<1x1x10x18x4xbf16, #tpu.memory_space<vmem>>, vector<1x1x8x16x4xbf16>
    %10 = vector.shape_cast %9 : vector<1x1x8x16x4xbf16> to vector<8x16x4xbf16>
    %11 = vector.shape_cast %10 : vector<8x16x4xbf16> to vector<128x4xbf16>
    %c0_17 = arith.constant 0 : index
    %c0_18 = arith.constant 0 : index
    %c1_19 = arith.constant 1 : index
    %c1_20 = arith.constant 1 : index
    %c0_21 = arith.constant 0 : index
    %12 = vector.load %arg3[%c0_17, %c0_18, %c1_19, %c1_20, %c0_21] : memref<1x1x10x18x4xbf16, #tpu.memory_space<vmem>>, vector<1x1x8x16x4xbf16>
    %13 = vector.shape_cast %12 : vector<1x1x8x16x4xbf16> to vector<8x16x4xbf16>
    %14 = vector.shape_cast %13 : vector<8x16x4xbf16> to vector<128x4xbf16>
    %c0_22 = arith.constant 0 : index
    %c0_23 = arith.constant 0 : index
    %c1_24 = arith.constant 1 : index
    %c2_25 = arith.constant 2 : index
    %c0_26 = arith.constant 0 : index
    %15 = vector.load %arg3[%c0_22, %c0_23, %c1_24, %c2_25, %c0_26] : memref<1x1x10x18x4xbf16, #tpu.memory_space<vmem>>, vector<1x1x8x16x4xbf16>
    %16 = vector.shape_cast %15 : vector<1x1x8x16x4xbf16> to vector<8x16x4xbf16>
    %17 = vector.shape_cast %16 : vector<8x16x4xbf16> to vector<128x4xbf16>
    %c0_27 = arith.constant 0 : index
    %c0_28 = arith.constant 0 : index
    %c2_29 = arith.constant 2 : index
    %c0_30 = arith.constant 0 : index
    %c0_31 = arith.constant 0 : index
    %18 = vector.load %arg3[%c0_27, %c0_28, %c2_29, %c0_30, %c0_31] : memref<1x1x10x18x4xbf16, #tpu.memory_space<vmem>>, vector<1x1x8x16x4xbf16>
    %19 = vector.shape_cast %18 : vector<1x1x8x16x4xbf16> to vector<8x16x4xbf16>
    %20 = vector.shape_cast %19 : vector<8x16x4xbf16> to vector<128x4xbf16>
    %c0_32 = arith.constant 0 : index
    %c0_33 = arith.constant 0 : index
    %c2_34 = arith.constant 2 : index
    %c1_35 = arith.constant 1 : index
    %c0_36 = arith.constant 0 : index
    %21 = vector.load %arg3[%c0_32, %c0_33, %c2_34, %c1_35, %c0_36] : memref<1x1x10x18x4xbf16, #tpu.memory_space<vmem>>, vector<1x1x8x16x4xbf16>
    %22 = vector.shape_cast %21 : vector<1x1x8x16x4xbf16> to vector<8x16x4xbf16>
    %23 = vector.shape_cast %22 : vector<8x16x4xbf16> to vector<128x4xbf16>
    %c0_37 = arith.constant 0 : index
    %c0_38 = arith.constant 0 : index
    %c2_39 = arith.constant 2 : index
    %c2_40 = arith.constant 2 : index
    %c0_41 = arith.constant 0 : index
    %24 = vector.load %arg3[%c0_37, %c0_38, %c2_39, %c2_40, %c0_41] : memref<1x1x10x18x4xbf16, #tpu.memory_space<vmem>>, vector<1x1x8x16x4xbf16>
    %25 = vector.shape_cast %24 : vector<1x1x8x16x4xbf16> to vector<8x16x4xbf16>
    %26 = vector.shape_cast %25 : vector<8x16x4xbf16> to vector<128x4xbf16>
    %27 = tpu.concatenate %2, %5, %8, %11, %14, %17, %20, %23, %26 in 1 : vector<128x4xbf16>, vector<128x4xbf16>, vector<128x4xbf16>, vector<128x4xbf16>, vector<128x4xbf16>, vector<128x4xbf16>, vector<128x4xbf16>, vector<128x4xbf16>, vector<128x4xbf16> -> vector<128x36xbf16>
    %c0_42 = arith.constant 0 : index
    %c0_43 = arith.constant 0 : index
    %28 = vector.load %arg4[%c0_42, %c0_43] : memref<36x128xbf16, #tpu.memory_space<vmem>>, vector<36x128xbf16>
    %cst = arith.constant dense<0.000000e+00> : vector<128x128xf32>
    %29 = tpu.matmul %27, %28, %cst {dimension_numbers = #tpu.dot_dimension_numbers<[1], [0], [0], [1], [0, 0, 1, 1], [], []>} : vector<128x36xbf16>, vector<36x128xbf16>, vector<128x128xf32> -> vector<128x128xf32>
    %c0_44 = arith.constant 0 : index
    %c0_45 = arith.constant 0 : index
    %30 = vector.load %arg5[%c0_44, %c0_45] : memref<1x128xf32, #tpu.memory_space<vmem>>, vector<1x128xf32>
    %31 = vector.broadcast %30 : vector<1x128xf32> to vector<128x128xf32>
    %32 = arith.addf %29, %31 : vector<128x128xf32>
    %cst_46 = arith.constant 0.000000e+00 : f32
    %33 = vector.broadcast %cst_46 : f32 to vector<128x128xf32>
    %34 = arith.maximumf %32, %33 : vector<128x128xf32>
    %35 = arith.truncf %34 : vector<128x128xf32> to vector<128x128xbf16>
    %36 = vector.shape_cast %35 : vector<128x128xbf16> to vector<8x16x128xbf16>
    %c0_47 = arith.constant 0 : index
    %c0_48 = arith.constant 0 : index
    %c0_49 = arith.constant 0 : index
    %c0_50 = arith.constant 0 : index
    %37 = vector.load %arg6[%c0_47, %c0_48, %c0_49, %c0_50] : memref<1x8x16x128xbf16, #tpu.memory_space<vmem>>, vector<1x8x16x128xbf16>
    %38 = vector.shape_cast %37 : vector<1x8x16x128xbf16> to vector<8x16x128xbf16>
    %39 = vector.shape_cast %36 : vector<8x16x128xbf16> to vector<1x8x16x128xbf16>
    tpu.vector_store %arg6[%c0_47, %c0_48, %c0_49, %c0_50], %39 {strides = array<i32>} : memref<1x8x16x128xbf16, #tpu.memory_space<vmem>>, vector<1x8x16x128xbf16>,
    return
  }
  func.func @transform_0(%arg0: i32, %arg1: i32, %arg2: i32) -> (i32, i32, i32, i32, i32) {
    %c0_i32 = arith.constant 0 : i32
    %c0_i32_0 = arith.constant 0 : i32
    %c0_i32_1 = arith.constant 0 : i32
    %c0_i32_2 = arith.constant 0 : i32
    return %arg1, %arg2, %c0_i32, %c0_i32_0, %c0_i32_1 : i32, i32, i32, i32, i32
  }
  func.func @transform_1(%arg0: i32, %arg1: i32, %arg2: i32) -> (i32, i32) {
    %c0_i32 = arith.constant 0 : i32
    %c0_i32_0 = arith.constant 0 : i32
    return %c0_i32, %arg0 : i32, i32
  }
  func.func @transform_2(%arg0: i32, %arg1: i32, %arg2: i32) -> (i32, i32) {
    %c0_i32 = arith.constant 0 : i32
    %c0_i32_0 = arith.constant 0 : i32
    return %c0_i32, %arg0 : i32, i32
  }
  func.func @transform_3(%arg0: i32, %arg1: i32, %arg2: i32) -> (i32, i32, i32, i32) {
    %c0_i32 = arith.constant 0 : i32
    %c0_i32_0 = arith.constant 0 : i32
    return %arg1, %arg2, %c0_i32, %arg0 : i32, i32, i32, i32
  }
}

</mosaic_0001>

<llo_original>
// kernel: conv_block_forward.1
$region0: #{conv_block_forward.1}
  #allocation0 [shape = 'u32[]', space=smem, size = 0x4, offset = 0x4, fixed_abs, tag = 'smem constant byte address 0x4 - core index']
  #allocation1 [shape = 'u32[72,128]{1,0:T(1,128)}', space=vmem, size = 0x9000, scoped, tag = 'internal scratch']
  %s0 = inlined_call_operand.vmem [shape: bf16[2,2,10,18,4], index: 0, kind: input, shape index: {}]
  %s1 = inlined_call_operand.vmem [shape: bf16[36,128], index: 1, kind: input, shape index: {}]
  %s2 = inlined_call_operand.vmem [shape: f32[1,128], index: 2, kind: input, shape index: {}]
  %s3 = inlined_call_operand.vmem [shape: bf16[2,16,16,128], index: 3, kind: output, shape index: {}]
  %s4 = sld [smem:[#allocation0]]
  $region45: #{conv_block_forward.1} parent=0
    _
  %s6 = ssub.s32 1, %s4
  %s7 = scalar_select 0, %s6, %s4
  loop: start=0, step=1, limit=6
  $region2: #{conv_block_forward.1} parent=0 // loop_pre_header
    _
  $region3: #{conv_block_forward.1} parent=0 // loop_header
    %s9 = sphi 0, %s13
    %p10 = scmp.ge.s32.totalorder %s9, 6
    %s16 = sphi 0, %s35
    %s17 = sphi 0, %s31
    %s18 = sphi 0, %s27
    %s19 = sphi 0, %s16
    %s20 = sphi 0, %s17
    %s21 = sphi 0, %s18
    %s22 = sphi 0, %s19
    %s23 = sphi 0, %s20
    %s24 = sphi 0, %s21
    %s40 = sphi 0, %s42
    %s43 = sphi 0, %s40
    %s44 = sphi 0, %s43
    %s60 = sphi 0, %s44
    %s66 = sphi 0, %s68
    %s69 = sphi 0, %s66
    %s70 = sphi 0, %s69
    %s86 = sphi 0, %s70
    %s92 = sphi 0, %s94
    %s95 = sphi 0, %s92
    %s96 = sphi 0, %s95
    %s112 = sphi 0, %s96
    %s122 = sphi 0, %s124
    %s125 = sphi 0, %s122
    %s126 = sphi 0, %s125
    %s142 = sphi 0, %s126
  $region4: #{conv_block_forward.1} parent=0 // loop_header_branch
    %12 = sbr.rel (%p10) target = $region8
  $region5: #{conv_block_forward.1} parent=0 // loop_body
    %s14 = ssub.s32 %s9, 1
    %s15 = ssub.s32 %s9, 2
    %s25 = sadd.s32 1, %s18
    %p26 = scmp.ge.s32.totalorder %s25, 2
    %s27 = scalar_select %p26, 0, %s25
    %s28 = sadd.s32 1, %s17
    %s29 = scalar_select %p26, %s28, %s17
    %p30 = scmp.ge.s32.totalorder %s29, 2
    %s31 = scalar_select %p30, 0, %s29
    %s32 = sadd.s32 1, %s16
    %s33 = scalar_select %p30, %s32, %s16
    %p34 = scmp.ge.s32.totalorder %s33, 1
    %s35 = scalar_select %p34, 0, %s33
    %s36 = ssub.s32 %s17, %s31
    %s37 = ssub.s32 %s18, %s27
    %s38 = sor.u32 %s36, %s37
    %p39 = scmp.eq.s32.totalorder %s38, 0
    %s41 = sadd.s32 %s40, 1
    %s42 = scalar_select %p39, %s40, %s41
    %p45 = pneg %p39
    %p46 = scmp.eq.s32.totalorder %s9, 3
    %p47 = por %p45, %p46
    %p48 = scmp.ne.s32.totalorder %s40, %s43
    %p49 = scmp.eq.s32.totalorder %s9, 0
    %p50 = por %p48, %p49
    %p51 = scmp.ne.s32.totalorder %s40, %s43
    %p52 = scmp.eq.s32.totalorder %s14, 3
    %p53 = por %p51, %p52
    %p54 = scmp.ne.s32.totalorder %s43, %s44
    %p55 = scmp.eq.s32.totalorder %s14, 0
    %p56 = por %p54, %p55
    %p57 = scmp.ne.s32.totalorder %s43, %s44
    %p58 = scmp.eq.s32.totalorder %s15, 3
    %p59 = por %p57, %p58
    %p61 = scmp.ne.s32.totalorder %s44, %s60
    %p62 = scmp.eq.s32.totalorder %s15, 0
    %p63 = por %p61, %p62
    %s64 = ssub.s32 %s16, %s35
    %p65 = scmp.eq.s32.totalorder %s64, 0
    %s67 = sadd.s32 %s66, 1
    %s68 = scalar_select %p65, %s66, %s67
    %p71 = pneg %p65
    %p72 = scmp.eq.s32.totalorder %s9, 3
    %p73 = por %p71, %p72
    %p74 = scmp.ne.s32.totalorder %s66, %s69
    %p75 = scmp.eq.s32.totalorder %s9, 0
    %p76 = por %p74, %p75
    %p77 = scmp.ne.s32.totalorder %s66, %s69
    %p78 = scmp.eq.s32.totalorder %s14, 3
    %p79 = por %p77, %p78
    %p80 = scmp.ne.s32.totalorder %s69, %s70
    %p81 = scmp.eq.s32.totalorder %s14, 0
    %p82 = por %p80, %p81
    %p83 = scmp.ne.s32.totalorder %s69, %s70
    %p84 = scmp.eq.s32.totalorder %s15, 3
    %p85 = por %p83, %p84
    %p87 = scmp.ne.s32.totalorder %s70, %s86
    %p88 = scmp.eq.s32.totalorder %s15, 0
    %p89 = por %p87, %p88
    %s90 = ssub.s32 %s16, %s35
    %p91 = scmp.eq.s32.totalorder %s90, 0
    %s93 = sadd.s32 %s92, 1
    %s94 = scalar_select %p91, %s92, %s93
    %p97 = pneg %p91
    %p98 = scmp.eq.s32.totalorder %s9, 3
    %p99 = por %p97, %p98
    %p100 = scmp.ne.s32.totalorder %s92, %s95
    %p101 = scmp.eq.s32.totalorder %s9, 0
    %p102 = por %p100, %p101
    %p103 = scmp.ne.s32.totalorder %s92, %s95
    %p104 = scmp.eq.s32.totalorder %s14, 3
    %p105 = por %p103, %p104
    %p106 = scmp.ne.s32.totalorder %s95, %s96
    %p107 = scmp.eq.s32.totalorder %s14, 0
    %p108 = por %p106, %p107
    %p109 = scmp.ne.s32.totalorder %s95, %s96
    %p110 = scmp.eq.s32.totalorder %s15, 3
    %p111 = por %p109, %p110
    %p113 = scmp.ne.s32.totalorder %s96, %s112
    %p114 = scmp.eq.s32.totalorder %s15, 0
    %p115 = por %p113, %p114
    %s116 = ssub.s32 %s17, %s31
    %s117 = ssub.s32 %s18, %s27
    %s118 = sor.u32 %s116, %s117
    %s119 = ssub.s32 %s16, %s35
    %s120 = sor.u32 %s118, %s119
    %p121 = scmp.eq.s32.totalorder %s120, 0
    %s123 = sadd.s32 %s122, 1
    %s124 = scalar_select %p121, %s122, %s123
    %p127 = pneg %p121
    %p128 = scmp.eq.s32.totalorder %s9, 3
    %p129 = por %p127, %p128
    %p130 = scmp.ne.s32.totalorder %s122, %s125
    %p131 = scmp.eq.s32.totalorder %s9, 0
    %p132 = por %p130, %p131
    %p133 = scmp.ne.s32.totalorder %s122, %s125
    %p134 = scmp.eq.s32.totalorder %s14, 3
    %p135 = por %p133, %p134
    %p136 = scmp.ne.s32.totalorder %s125, %s126
    %p137 = scmp.eq.s32.totalorder %s14, 0
    %p138 = por %p136, %p137
    %p139 = scmp.ne.s32.totalorder %s125, %s126
    %p140 = scmp.eq.s32.totalorder %s15, 3
    %p141 = por %p139, %p140
    %p143 = scmp.ne.s32.totalorder %s126, %s142
    %p144 = scmp.eq.s32.totalorder %s15, 0
    %p145 = por %p143, %p144
    %p146 = scmp.le.s32.totalorder 1, %s9
    %p147 = scmp.lt.s32.totalorder %s9, 5
    %p148 = pnand %p146, %p147
    %p149 = pneg %p148
    // Predicated region
    $region9: #{conv_block_forward.1} parent=5 // pred_check
      _
    $region10: #{conv_block_forward.1} parent=5 // pred_check_branch
      %151 = sbr.rel (%p148) target = $region12
    $region11: #{conv_block_forward.1} parent=5 // pred_region
      %s152 = ssub.s32 %s9, 1
      // Predicated region
      $region13: #{conv_block_forward.1} parent=11 // pred_check
        %p153 = pneg %p82
      $region14: #{conv_block_forward.1} parent=11 // pred_check_branch
        %155 = sbr.rel (%p153) target = $region16
      $region15: #{conv_block_forward.1} parent=11 // pred_region
        %p156 = scmp.lt.s32.totalorder %s19, 0
        %s157 = scalar_select %p156, %s19, 0
        %s158 = smul.addr %s157, 4
        %s159 = scalar_lea.vmem %s1, %s158
      $region16: #{conv_block_forward.1} parent=11 // pred_fallthru
        _
      // Predicated region
      $region17: #{conv_block_forward.1} parent=11 // pred_check
        %p160 = pneg %p108
      $region18: #{conv_block_forward.1} parent=11 // pred_check_branch
        %162 = sbr.rel (%p160) target = $region20
      $region19: #{conv_block_forward.1} parent=11 // pred_region
        %p163 = scmp.lt.s32.totalorder %s19, 0
        %s164 = scalar_select %p163, %s19, 0
        %s165 = scalar_lea.vmem %s2, %s164
      $region20: #{conv_block_forward.1} parent=11 // pred_fallthru
        _
    $region12: #{conv_block_forward.1} parent=5 // pred_fallthru
      _
    %p166 = scmp.lt.s32.totalorder %s9, 4
    // Predicated region
    $region21: #{conv_block_forward.1} parent=5 // pred_check
      %p167 = pneg %p166
    $region22: #{conv_block_forward.1} parent=5 // pred_check_branch
      %169 = sbr.rel (%p167) target = $region24
    $region23: #{conv_block_forward.1} parent=5 // pred_region
      // Predicated region
      $region25: #{conv_block_forward.1} parent=23 // pred_check
        %p170 = pneg %p50
      $region26: #{conv_block_forward.1} parent=23 // pred_check_branch
        %172 = sbr.rel (%p170) target = $region28
      $region27: #{conv_block_forward.1} parent=23 // pred_region
        %p173 = scmp.lt.s32.totalorder %s17, 1
        %s174 = scalar_select %p173, %s17, 1
        %p175 = scmp.lt.s32.totalorder %s18, 1
        %s176 = scalar_select %p175, %s18, 1
        %s177 = smul.addr %s176, 30
        %s178 = smul.addr %s174, 60
        %s179 = sadd.s32 %s177, %s178
        %s180 = smul.addr %s179, 4
        %s181 = scalar_lea.vmem %s0, %s180
      $region28: #{conv_block_forward.1} parent=23 // pred_fallthru
        _
    $region24: #{conv_block_forward.1} parent=5 // pred_fallthru
      _
    %p182 = scmp.le.s32.totalorder 1, %s9
    %p183 = scmp.lt.s32.totalorder %s9, 5
    %p184 = pnand %p182, %p183
    %p185 = pneg %p184
    // Predicated region
    $region29: #{conv_block_forward.1} parent=5 // pred_check
      _
    $region30: #{conv_block_forward.1} parent=5 // pred_check_branch
      %187 = sbr.rel (%p184) target = $region32
    $region31: #{conv_block_forward.1} parent=5 // pred_region
      %s188 = ssub.s32 %s9, 1
      %p189 = scmp.lt.s32.totalorder %s20, 1
      %s190 = scalar_select %p189, %s20, 1
      %p191 = scmp.lt.s32.totalorder %s21, 1
      %s192 = scalar_select %p191, %s21, 1
      %s193 = smul.addr %s192, 30
      %s194 = smul.addr %s190, 60
      %s195 = sadd.s32 %s193, %s194
      %s196 = smul.addr %s195, 4
      %s197 = scalar_lea.vmem %s0, %s196
      %p198 = pneg %p56
      %p199 = pneg %p53
      %p200 = scmp.lt.s32.totalorder %s19, 0
      %s201 = scalar_select %p200, %s19, 0
      %s202 = smul.addr %s201, 4
      %s203 = scalar_lea.vmem %s1, %s202
      %p204 = pneg %p82
      %p205 = pneg %p79
      %p206 = scmp.lt.s32.totalorder %s19, 0
      %s207 = scalar_select %p206, %s19, 0
      %s208 = scalar_lea.vmem %s2, %s207
      %p209 = pneg %p108
      %p210 = pneg %p105
      %p211 = pneg %p138
      %p212 = pneg %p135
      %s213 = smul.u32 8, %s21
      %p214 = scmp.lt.s32.totalorder %s20, 1
      %s215 = scalar_select %p214, %s20, 1
      %p216 = scmp.lt.s32.totalorder %s213, 15
      %s217 = scalar_select %p216, %s213, 15
      %p218 = scmp.lt.s32.totalorder %s19, 0
      %s219 = scalar_select %p218, %s19, 0
      %s220 = smul.addr %s217, 2
      %s221 = sadd.s32 %s219, %s220
      %s222 = smul.addr %s215, 32
      %s223 = sadd.s32 %s221, %s222
      %s224 = smul.addr %s223, 4
      %s225 = scalar_lea.vmem %s3, %s224
      %p226 = scmp.lt.s32.totalorder %s20, 1
      %s227 = scalar_select %p226, %s20, 1
      %p228 = scmp.lt.s32.totalorder %s21, 1
      %s229 = scalar_select %p228, %s21, 1
      %s230 = smul.addr %s229, 30
      %s231 = smul.addr %s227, 60
      %s232 = sadd.s32 %s230, %s231
      %s233 = smul.addr %s232, 4
      %s234 = scalar_lea.vmem %s0, %s233
      %p235 = scmp.lt.s32.totalorder %s19, 0
      %s236 = scalar_select %p235, %s19, 0
      %s237 = smul.addr %s236, 4
      %s238 = scalar_lea.vmem %s1, %s237
      %p239 = scmp.lt.s32.totalorder %s19, 0
      %s240 = scalar_select %p239, %s19, 0
      %s241 = scalar_lea.vmem %s2, %s240
      %s242 = smul.u32 8, %s21
      %p243 = scmp.lt.s32.totalorder %s20, 1
      %s244 = scalar_select %p243, %s20, 1
      %p245 = scmp.lt.s32.totalorder %s242, 15
      %s246 = scalar_select %p245, %s242, 15
      %p247 = scmp.lt.s32.totalorder %s19, 0
      %s248 = scalar_select %p247, %s19, 0
      %s249 = smul.addr %s246, 2
      %s250 = sadd.s32 %s248, %s249
      %s251 = smul.addr %s244, 32
      %s252 = sadd.s32 %s250, %s251
      %s253 = smul.addr %s252, 4
      %s254 = scalar_lea.vmem %s3, %s253
      %s255 = smul.u32 8, %s21
      %v257 = vld [vmem:[%s234] sm:$0xf]
      %v258 = vld [vmem:[%s234 + $0x4] sm:$0xf]
      %v259 = vld [vmem:[%s234 + $0xc] sm:$0xf]
      %v260 = vld [vmem:[%s234 + $0x10] sm:$0xf]
      %v261 = vld [vmem:[%s234 + $0x18] sm:$0xf]
      %v262 = vld [vmem:[%s234 + $0x1c] sm:$0xf]
      %v263 = vld [vmem:[%s234 + $0x24] sm:$0xf]
      %v264 = vld [vmem:[%s234 + $0x28] sm:$0xf]
      %v265 = vld [vmem:[%s234 + $0x30] sm:$0xf]
      %v266 = vld [vmem:[%s234 + $0x34] sm:$0xf]
      %v267 = vld [vmem:[%s234 + $0x3c] sm:$0xf]
      %v268 = vld [vmem:[%s234 + $0x40] sm:$0xf]
      %v269 = vld [vmem:[%s234 + $0x48] sm:$0xf]
      %v270 = vld [vmem:[%s234 + $0x4c] sm:$0xf]
      %v271 = vld [vmem:[%s234 + $0x54] sm:$0xf]
      %v272 = vld [vmem:[%s234 + $0x58] sm:$0xf]
      %v273 = vld [vmem:[%s234 + $0x8] sm:$0x1]
      %v274 = vld [vmem:[%s234 + $0x14] sm:$0x1]
      %v275 = vld [vmem:[%s234 + $0x20] sm:$0x1]
      %v276 = vld [vmem:[%s234 + $0x2c] sm:$0x1]
      %v277 = vld [vmem:[%s234 + $0x38] sm:$0x1]
      %v278 = vld [vmem:[%s234 + $0x44] sm:$0x1]
      %v279 = vld [vmem:[%s234 + $0x50] sm:$0x1]
      %v280 = vld [vmem:[%s234 + $0x5c] sm:$0x1]
      %vm281 = vsmask.f32 3328
      %vm282 = vsmask.f32 7440
      %vm283 = vmor %vm281, %vm282
      %v285 = vshrl.u32 %v257, 16
      %v287 = vrot.slane %v285, 4
      %v288 = vshll.u32 %v257, 16
      %v290 = vrot.slane %v288, 5
      %v291 = vor.u32 %v287, %v290
      %v292 = vrot.slane %v291, 4
      %v294 = vshll.u32 %v258, 16
      %v296 = vrot.slane %v294, 5
      %v297 = vsel %vm283, %v292, %v296
      %v298 = vshrl.u32 %v258, 16
      %v300 = vrot.slane %v298, 4
      %v301 = vor.u32 %v300, %v296
      %v302 = vrot.slane %v301, 4
      %v304 = vshll.u32 %v273, 16
      %v306 = vrot.slane %v304, 5
      %v307 = vsel %vm283, %v302, %v306
      %v309 = vshrl.u32 %v259, 16
      %v311 = vrot.slane %v309, 4
      %v312 = vshll.u32 %v259, 16
      %v314 = vrot.slane %v312, 5
      %v315 = vor.u32 %v311, %v314
      %v316 = vrot.slane %v315, 4
      %v318 = vshll.u32 %v260, 16
      %v320 = vrot.slane %v318, 5
      %v321 = vsel %vm283, %v316, %v320
      %v322 = vshrl.u32 %v260, 16
      %v324 = vrot.slane %v322, 4
      %v325 = vor.u32 %v324, %v320
      %v326 = vrot.slane %v325, 4
      %v328 = vshll.u32 %v274, 16
      %v330 = vrot.slane %v328, 5
      %v331 = vsel %vm283, %v326, %v330
      %v333 = vshrl.u32 %v261, 16
      %v335 = vrot.slane %v333, 4
      %v336 = vshll.u32 %v261, 16
      %v338 = vrot.slane %v336, 5
      %v339 = vor.u32 %v335, %v338
      %v340 = vrot.slane %v339, 4
      %v342 = vshll.u32 %v262, 16
      %v344 = vrot.slane %v342, 5
      %v345 = vsel %vm283, %v340, %v344
      %v346 = vshrl.u32 %v262, 16
      %v348 = vrot.slane %v346, 4
      %v349 = vor.u32 %v348, %v344
      %v350 = vrot.slane %v349, 4
      %v352 = vshll.u32 %v275, 16
      %v354 = vrot.slane %v352, 5
      %v355 = vsel %vm283, %v350, %v354
      %v357 = vshrl.u32 %v263, 16
      %v359 = vrot.slane %v357, 4
      %v360 = vshll.u32 %v263, 16
      %v362 = vrot.slane %v360, 5
      %v363 = vor.u32 %v359, %v362
      %v364 = vrot.slane %v363, 4
      %v366 = vshll.u32 %v264, 16
      %v368 = vrot.slane %v366, 5
      %v369 = vsel %vm283, %v364, %v368
      %v370 = vshrl.u32 %v264, 16
      %v372 = vrot.slane %v370, 4
      %v373 = vor.u32 %v372, %v368
      %v374 = vrot.slane %v373, 4
      %v376 = vshll.u32 %v276, 16
      %v378 = vrot.slane %v376, 5
      %v379 = vsel %vm283, %v374, %v378
      %v381 = vshrl.u32 %v265, 16
      %v383 = vrot.slane %v381, 4
      %v384 = vshll.u32 %v265, 16
      %v386 = vrot.slane %v384, 5
      %v387 = vor.u32 %v383, %v386
      %v388 = vrot.slane %v387, 4
      %v390 = vshll.u32 %v266, 16
      %v392 = vrot.slane %v390, 5
      %v393 = vsel %vm283, %v388, %v392
      %v394 = vshrl.u32 %v266, 16
      %v396 = vrot.slane %v394, 4
      %v397 = vor.u32 %v396, %v392
      %v398 = vrot.slane %v397, 4
      %v400 = vshll.u32 %v277, 16
      %v402 = vrot.slane %v400, 5
      %v403 = vsel %vm283, %v398, %v402
      %v405 = vshrl.u32 %v267, 16
      %v407 = vrot.slane %v405, 4
      %v408 = vshll.u32 %v267, 16
      %v410 = vrot.slane %v408, 5
      %v411 = vor.u32 %v407, %v410
      %v412 = vrot.slane %v411, 4
      %v414 = vshll.u32 %v268, 16
      %v416 = vrot.slane %v414, 5
      %v417 = vsel %vm283, %v412, %v416
      %v418 = vshrl.u32 %v268, 16
      %v420 = vrot.slane %v418, 4
      %v421 = vor.u32 %v420, %v416
      %v422 = vrot.slane %v421, 4
      %v424 = vshll.u32 %v278, 16
      %v426 = vrot.slane %v424, 5
      %v427 = vsel %vm283, %v422, %v426
      %v429 = vshrl.u32 %v269, 16
      %v431 = vrot.slane %v429, 4
      %v432 = vshll.u32 %v269, 16
      %v434 = vrot.slane %v432, 5
      %v435 = vor.u32 %v431, %v434
      %v436 = vrot.slane %v435, 4
      %v438 = vshll.u32 %v270, 16
      %v440 = vrot.slane %v438, 5
      %v441 = vsel %vm283, %v436, %v440
      %v442 = vshrl.u32 %v270, 16
      %v444 = vrot.slane %v442, 4
      %v445 = vor.u32 %v444, %v440
      %v446 = vrot.slane %v445, 4
      %v448 = vshll.u32 %v279, 16
      %v450 = vrot.slane %v448, 5
      %v451 = vsel %vm283, %v446, %v450
      %v453 = vshrl.u32 %v271, 16
      %v455 = vrot.slane %v453, 4
      %v456 = vshll.u32 %v271, 16
      %v458 = vrot.slane %v456, 5
      %v459 = vor.u32 %v455, %v458
      %v460 = vrot.slane %v459, 4
      %v462 = vshll.u32 %v272, 16
      %v464 = vrot.slane %v462, 5
      %v465 = vsel %vm283, %v460, %v464
      %v466 = vshrl.u32 %v272, 16
      %v468 = vrot.slane %v466, 4
      %v469 = vor.u32 %v468, %v464
      %v470 = vrot.slane %v469, 4
      %v472 = vshll.u32 %v280, 16
      %v474 = vrot.slane %v472, 5
      %v475 = vsel %vm283, %v470, %v474
      %v476 = vld [vmem:[%s234] sm:$0xe]
      %v477 = vld [vmem:[%s234 + $0xc] sm:$0xe]
      %v478 = vld [vmem:[%s234 + $0x18] sm:$0xe]
      %v479 = vld [vmem:[%s234 + $0x24] sm:$0xe]
      %v480 = vld [vmem:[%s234 + $0x30] sm:$0xe]
      %v481 = vld [vmem:[%s234 + $0x3c] sm:$0xe]
      %v482 = vld [vmem:[%s234 + $0x48] sm:$0xe]
      %v483 = vld [vmem:[%s234 + $0x54] sm:$0xe]
      %vm508 = vcmask 1042432
      %vm509 = vcmask 1046532
      %vm510 = vmor %vm508, %vm509
      %v511 = vrot.slane %v476, 5
      %v512 = vrot.slane %v511, 4
      %v513 = vrot.slane %v258, 5
      %v514 = vsel %vm510, %v512, %v513
      %v515 = vrot.slane %v513, 4
      %v516 = vrot.slane %v273, 5
      %v517 = vsel %vm510, %v515, %v516
      %v518 = vrot.slane %v477, 5
      %v519 = vrot.slane %v518, 4
      %v520 = vrot.slane %v260, 5
      %v521 = vsel %vm510, %v519, %v520
      %v522 = vrot.slane %v520, 4
      %v523 = vrot.slane %v274, 5
      %v524 = vsel %vm510, %v522, %v523
      %v525 = vrot.slane %v478, 5
      %v526 = vrot.slane %v525, 4
      %v527 = vrot.slane %v262, 5
      %v528 = vsel %vm510, %v526, %v527
      %v529 = vrot.slane %v527, 4
      %v530 = vrot.slane %v275, 5
      %v531 = vsel %vm510, %v529, %v530
      %v532 = vrot.slane %v479, 5
      %v533 = vrot.slane %v532, 4
      %v534 = vrot.slane %v264, 5
      %v535 = vsel %vm510, %v533, %v534
      %v536 = vrot.slane %v534, 4
      %v537 = vrot.slane %v276, 5
      %v538 = vsel %vm510, %v536, %v537
      %v539 = vrot.slane %v480, 5
      %v540 = vrot.slane %v539, 4
      %v541 = vrot.slane %v266, 5
      %v542 = vsel %vm510, %v540, %v541
      %v543 = vrot.slane %v541, 4
      %v544 = vrot.slane %v277, 5
      %v545 = vsel %vm510, %v543, %v544
      %v546 = vrot.slane %v481, 5
      %v547 = vrot.slane %v546, 4
      %v548 = vrot.slane %v268, 5
      %v549 = vsel %vm510, %v547, %v548
      %v550 = vrot.slane %v548, 4
      %v551 = vrot.slane %v278, 5
      %v552 = vsel %vm510, %v550, %v551
      %v553 = vrot.slane %v482, 5
      %v554 = vrot.slane %v553, 4
      %v555 = vrot.slane %v270, 5
      %v556 = vsel %vm510, %v554, %v555
      %v557 = vrot.slane %v555, 4
      %v558 = vrot.slane %v279, 5
      %v559 = vsel %vm510, %v557, %v558
      %v560 = vrot.slane %v483, 5
      %v561 = vrot.slane %v560, 4
      %v562 = vrot.slane %v272, 5
      %v563 = vsel %vm510, %v561, %v562
      %v564 = vrot.slane %v562, 4
      %v565 = vrot.slane %v280, 5
      %v566 = vsel %vm510, %v564, %v565
      %s567 = scalar_lea.vmem %s234, 12
      %v568 = vld [vmem:[%s567] sm:$0xf]
      %v569 = vld [vmem:[%s567 + $0x4] sm:$0xf]
      %v570 = vld [vmem:[%s567 + $0xc] sm:$0xf]
      %v571 = vld [vmem:[%s567 + $0x10] sm:$0xf]
      %v572 = vld [vmem:[%s567 + $0x18] sm:$0xf]
      %v573 = vld [vmem:[%s567 + $0x1c] sm:$0xf]
      %v574 = vld [vmem:[%s567 + $0x24] sm:$0xf]
      %v575 = vld [vmem:[%s567 + $0x28] sm:$0xf]
      %v576 = vld [vmem:[%s567 + $0x30] sm:$0xf]
      %v577 = vld [vmem:[%s567 + $0x34] sm:$0xf]
      %v578 = vld [vmem:[%s567 + $0x3c] sm:$0xf]
      %v579 = vld [vmem:[%s567 + $0x40] sm:$0xf]
      %v580 = vld [vmem:[%s567 + $0x48] sm:$0xf]
      %v581 = vld [vmem:[%s567 + $0x4c] sm:$0xf]
      %v582 = vld [vmem:[%s567 + $0x54] sm:$0xf]
      %v583 = vld [vmem:[%s567 + $0x58] sm:$0xf]
      %v584 = vld [vmem:[%s567 + $0x8] sm:$0x1]
      %v585 = vld [vmem:[%s567 + $0x14] sm:$0x1]
      %v586 = vld [vmem:[%s567 + $0x20] sm:$0x1]
      %v587 = vld [vmem:[%s567 + $0x2c] sm:$0x1]
      %v588 = vld [vmem:[%s567 + $0x38] sm:$0x1]
      %v589 = vld [vmem:[%s567 + $0x44] sm:$0x1]
      %v590 = vld [vmem:[%s567 + $0x50] sm:$0x1]
      %v591 = vld [vmem:[%s567 + $0x5c] sm:$0x1]
      %v593 = vshrl.u32 %v568, 16
      %v595 = vrot.slane %v593, 4
      %v596 = vshll.u32 %v568, 16
      %v598 = vrot.slane %v596, 5
      %v599 = vor.u32 %v595, %v598
      %v600 = vrot.slane %v599, 4
      %v602 = vshll.u32 %v569, 16
      %v604 = vrot.slane %v602, 5
      %v605 = vsel %vm283, %v600, %v604
      %v606 = vshrl.u32 %v569, 16
      %v608 = vrot.slane %v606, 4
      %v609 = vor.u32 %v608, %v604
      %v610 = vrot.slane %v609, 4
      %v612 = vshll.u32 %v584, 16
      %v614 = vrot.slane %v612, 5
      %v615 = vsel %vm283, %v610, %v614
      %v617 = vshrl.u32 %v570, 16
      %v619 = vrot.slane %v617, 4
      %v620 = vshll.u32 %v570, 16
      %v622 = vrot.slane %v620, 5
      %v623 = vor.u32 %v619, %v622
      %v624 = vrot.slane %v623, 4
      %v626 = vshll.u32 %v571, 16
      %v628 = vrot.slane %v626, 5
      %v629 = vsel %vm283, %v624, %v628
      %v630 = vshrl.u32 %v571, 16
      %v632 = vrot.slane %v630, 4
      %v633 = vor.u32 %v632, %v628
      %v634 = vrot.slane %v633, 4
      %v636 = vshll.u32 %v585, 16
      %v638 = vrot.slane %v636, 5
      %v639 = vsel %vm283, %v634, %v638
      %v641 = vshrl.u32 %v572, 16
      %v643 = vrot.slane %v641, 4
      %v644 = vshll.u32 %v572, 16
      %v646 = vrot.slane %v644, 5
      %v647 = vor.u32 %v643, %v646
      %v648 = vrot.slane %v647, 4
      %v650 = vshll.u32 %v573, 16
      %v652 = vrot.slane %v650, 5
      %v653 = vsel %vm283, %v648, %v652
      %v654 = vshrl.u32 %v573, 16
      %v656 = vrot.slane %v654, 4
      %v657 = vor.u32 %v656, %v652
      %v658 = vrot.slane %v657, 4
      %v660 = vshll.u32 %v586, 16
      %v662 = vrot.slane %v660, 5
      %v663 = vsel %vm283, %v658, %v662
      %v665 = vshrl.u32 %v574, 16
      %v667 = vrot.slane %v665, 4
      %v668 = vshll.u32 %v574, 16
      %v670 = vrot.slane %v668, 5
      %v671 = vor.u32 %v667, %v670
      %v672 = vrot.slane %v671, 4
      %v674 = vshll.u32 %v575, 16
      %v676 = vrot.slane %v674, 5
      %v677 = vsel %vm283, %v672, %v676
      %v678 = vshrl.u32 %v575, 16
      %v680 = vrot.slane %v678, 4
      %v681 = vor.u32 %v680, %v676
      %v682 = vrot.slane %v681, 4
      %v684 = vshll.u32 %v587, 16
      %v686 = vrot.slane %v684, 5
      %v687 = vsel %vm283, %v682, %v686
      %v689 = vshrl.u32 %v576, 16
      %v691 = vrot.slane %v689, 4
      %v692 = vshll.u32 %v576, 16
      %v694 = vrot.slane %v692, 5
      %v695 = vor.u32 %v691, %v694
      %v696 = vrot.slane %v695, 4
      %v698 = vshll.u32 %v577, 16
      %v700 = vrot.slane %v698, 5
      %v701 = vsel %vm283, %v696, %v700
      %v702 = vshrl.u32 %v577, 16
      %v704 = vrot.slane %v702, 4
      %v705 = vor.u32 %v704, %v700
      %v706 = vrot.slane %v705, 4
      %v708 = vshll.u32 %v588, 16
      %v710 = vrot.slane %v708, 5
      %v711 = vsel %vm283, %v706, %v710
      %v713 = vshrl.u32 %v578, 16
      %v715 = vrot.slane %v713, 4
      %v716 = vshll.u32 %v578, 16
      %v718 = vrot.slane %v716, 5
      %v719 = vor.u32 %v715, %v718
      %v720 = vrot.slane %v719, 4
      %v722 = vshll.u32 %v579, 16
      %v724 = vrot.slane %v722, 5
      %v725 = vsel %vm283, %v720, %v724
      %v726 = vshrl.u32 %v579, 16
      %v728 = vrot.slane %v726, 4
      %v729 = vor.u32 %v728, %v724
      %v730 = vrot.slane %v729, 4
      %v732 = vshll.u32 %v589, 16
      %v734 = vrot.slane %v732, 5
      %v735 = vsel %vm283, %v730, %v734
      %v737 = vshrl.u32 %v580, 16
      %v739 = vrot.slane %v737, 4
      %v740 = vshll.u32 %v580, 16
      %v742 = vrot.slane %v740, 5
      %v743 = vor.u32 %v739, %v742
      %v744 = vrot.slane %v743, 4
      %v746 = vshll.u32 %v581, 16
      %v748 = vrot.slane %v746, 5
      %v749 = vsel %vm283, %v744, %v748
      %v750 = vshrl.u32 %v581, 16
      %v752 = vrot.slane %v750, 4
      %v753 = vor.u32 %v752, %v748
      %v754 = vrot.slane %v753, 4
      %v756 = vshll.u32 %v590, 16
      %v758 = vrot.slane %v756, 5
      %v759 = vsel %vm283, %v754, %v758
      %v761 = vshrl.u32 %v582, 16
      %v763 = vrot.slane %v761, 4
      %v764 = vshll.u32 %v582, 16
      %v766 = vrot.slane %v764, 5
      %v767 = vor.u32 %v763, %v766
      %v768 = vrot.slane %v767, 4
      %v770 = vshll.u32 %v583, 16
      %v772 = vrot.slane %v770, 5
      %v773 = vsel %vm283, %v768, %v772
      %v774 = vshrl.u32 %v583, 16
      %v776 = vrot.slane %v774, 4
      %v777 = vor.u32 %v776, %v772
      %v778 = vrot.slane %v777, 4
      %v780 = vshll.u32 %v591, 16
      %v782 = vrot.slane %v780, 5
      %v783 = vsel %vm283, %v778, %v782
      %v784 = vld [vmem:[%s567] sm:$0xe]
      %v785 = vld [vmem:[%s567 + $0xc] sm:$0xe]
      %v786 = vld [vmem:[%s567 + $0x18] sm:$0xe]
      %v787 = vld [vmem:[%s567 + $0x24] sm:$0xe]
      %v788 = vld [vmem:[%s567 + $0x30] sm:$0xe]
      %v789 = vld [vmem:[%s567 + $0x3c] sm:$0xe]
      %v790 = vld [vmem:[%s567 + $0x48] sm:$0xe]
      %v791 = vld [vmem:[%s567 + $0x54] sm:$0xe]
      %v816 = vrot.slane %v784, 5
      %v817 = vrot.slane %v816, 4
      %v818 = vrot.slane %v569, 5
      %v819 = vsel %vm510, %v817, %v818
      %v820 = vrot.slane %v818, 4
      %v821 = vrot.slane %v584, 5
      %v822 = vsel %vm510, %v820, %v821
      %v823 = vrot.slane %v785, 5
      %v824 = vrot.slane %v823, 4
      %v825 = vrot.slane %v571, 5
      %v826 = vsel %vm510, %v824, %v825
      %v827 = vrot.slane %v825, 4
      %v828 = vrot.slane %v585, 5
      %v829 = vsel %vm510, %v827, %v828
      %v830 = vrot.slane %v786, 5
      %v831 = vrot.slane %v830, 4
      %v832 = vrot.slane %v573, 5
      %v833 = vsel %vm510, %v831, %v832
      %v834 = vrot.slane %v832, 4
      %v835 = vrot.slane %v586, 5
      %v836 = vsel %vm510, %v834, %v835
      %v837 = vrot.slane %v787, 5
      %v838 = vrot.slane %v837, 4
      %v839 = vrot.slane %v575, 5
      %v840 = vsel %vm510, %v838, %v839
      %v841 = vrot.slane %v839, 4
      %v842 = vrot.slane %v587, 5
      %v843 = vsel %vm510, %v841, %v842
      %v844 = vrot.slane %v788, 5
      %v845 = vrot.slane %v844, 4
      %v846 = vrot.slane %v577, 5
      %v847 = vsel %vm510, %v845, %v846
      %v848 = vrot.slane %v846, 4
      %v849 = vrot.slane %v588, 5
      %v850 = vsel %vm510, %v848, %v849
      %v851 = vrot.slane %v789, 5
      %v852 = vrot.slane %v851, 4
      %v853 = vrot.slane %v579, 5
      %v854 = vsel %vm510, %v852, %v853
      %v855 = vrot.slane %v853, 4
      %v856 = vrot.slane %v589, 5
      %v857 = vsel %vm510, %v855, %v856
      %v858 = vrot.slane %v790, 5
      %v859 = vrot.slane %v858, 4
      %v860 = vrot.slane %v581, 5
      %v861 = vsel %vm510, %v859, %v860
      %v862 = vrot.slane %v860, 4
      %v863 = vrot.slane %v590, 5
      %v864 = vsel %vm510, %v862, %v863
      %v865 = vrot.slane %v791, 5
      %v866 = vrot.slane %v865, 4
      %v867 = vrot.slane %v583, 5
      %v868 = vsel %vm510, %v866, %v867
      %v869 = vrot.slane %v867, 4
      %v870 = vrot.slane %v591, 5
      %v871 = vsel %vm510, %v869, %v870
      %s872 = scalar_lea.vmem %s234, 24
      %v873 = vld [vmem:[%s872] sm:$0xf]
      %v874 = vld [vmem:[%s872 + $0x4] sm:$0xf]
      %v875 = vld [vmem:[%s872 + $0xc] sm:$0xf]
      %v876 = vld [vmem:[%s872 + $0x10] sm:$0xf]
      %v877 = vld [vmem:[%s872 + $0x18] sm:$0xf]
      %v878 = vld [vmem:[%s872 + $0x1c] sm:$0xf]
      %v879 = vld [vmem:[%s872 + $0x24] sm:$0xf]
      %v880 = vld [vmem:[%s872 + $0x28] sm:$0xf]
      %v881 = vld [vmem:[%s872 + $0x30] sm:$0xf]
      %v882 = vld [vmem:[%s872 + $0x34] sm:$0xf]
      %v883 = vld [vmem:[%s872 + $0x3c] sm:$0xf]
      %v884 = vld [vmem:[%s872 + $0x40] sm:$0xf]
      %v885 = vld [vmem:[%s872 + $0x48] sm:$0xf]
      %v886 = vld [vmem:[%s872 + $0x4c] sm:$0xf]
      %v887 = vld [vmem:[%s872 + $0x54] sm:$0xf]
      %v888 = vld [vmem:[%s872 + $0x58] sm:$0xf]
      %v889 = vld [vmem:[%s872 + $0x8] sm:$0x1]
      %v890 = vld [vmem:[%s872 + $0x14] sm:$0x1]
      %v891 = vld [vmem:[%s872 + $0x20] sm:$0x1]
      %v892 = vld [vmem:[%s872 + $0x2c] sm:$0x1]
      %v893 = vld [vmem:[%s872 + $0x38] sm:$0x1]
      %v894 = vld [vmem:[%s872 + $0x44] sm:$0x1]
      %v895 = vld [vmem:[%s872 + $0x50] sm:$0x1]
      %v896 = vld [vmem:[%s872 + $0x5c] sm:$0x1]
      %v898 = vshrl.u32 %v873, 16
      %v900 = vrot.slane %v898, 4
      %v901 = vshll.u32 %v873, 16
      %v903 = vrot.slane %v901, 5
      %v904 = vor.u32 %v900, %v903
      %v905 = vrot.slane %v904, 4
      %v907 = vshll.u32 %v874, 16
      %v909 = vrot.slane %v907, 5
      %v910 = vsel %vm283, %v905, %v909
      %v911 = vshrl.u32 %v874, 16
      %v913 = vrot.slane %v911, 4
      %v914 = vor.u32 %v913, %v909
      %v915 = vrot.slane %v914, 4
      %v917 = vshll.u32 %v889, 16
      %v919 = vrot.slane %v917, 5
      %v920 = vsel %vm283, %v915, %v919
      %v922 = vshrl.u32 %v875, 16
      %v924 = vrot.slane %v922, 4
      %v925 = vshll.u32 %v875, 16
      %v927 = vrot.slane %v925, 5
      %v928 = vor.u32 %v924, %v927
      %v929 = vrot.slane %v928, 4
      %v931 = vshll.u32 %v876, 16
      %v933 = vrot.slane %v931, 5
      %v934 = vsel %vm283, %v929, %v933
      %v935 = vshrl.u32 %v876, 16
      %v937 = vrot.slane %v935, 4
      %v938 = vor.u32 %v937, %v933
      %v939 = vrot.slane %v938, 4
      %v941 = vshll.u32 %v890, 16
      %v943 = vrot.slane %v941, 5
      %v944 = vsel %vm283, %v939, %v943
      %v946 = vshrl.u32 %v877, 16
      %v948 = vrot.slane %v946, 4
      %v949 = vshll.u32 %v877, 16
      %v951 = vrot.slane %v949, 5
      %v952 = vor.u32 %v948, %v951
      %v953 = vrot.slane %v952, 4
      %v955 = vshll.u32 %v878, 16
      %v957 = vrot.slane %v955, 5
      %v958 = vsel %vm283, %v953, %v957
      %v959 = vshrl.u32 %v878, 16
      %v961 = vrot.slane %v959, 4
      %v962 = vor.u32 %v961, %v957
      %v963 = vrot.slane %v962, 4
      %v965 = vshll.u32 %v891, 16
      %v967 = vrot.slane %v965, 5
      %v968 = vsel %vm283, %v963, %v967
      %v970 = vshrl.u32 %v879, 16
      %v972 = vrot.slane %v970, 4
      %v973 = vshll.u32 %v879, 16
      %v975 = vrot.slane %v973, 5
      %v976 = vor.u32 %v972, %v975
      %v977 = vrot.slane %v976, 4
      %v979 = vshll.u32 %v880, 16
      %v981 = vrot.slane %v979, 5
      %v982 = vsel %vm283, %v977, %v981
      %v983 = vshrl.u32 %v880, 16
      %v985 = vrot.slane %v983, 4
      %v986 = vor.u32 %v985, %v981
      %v987 = vrot.slane %v986, 4
      %v989 = vshll.u32 %v892, 16
      %v991 = vrot.slane %v989, 5
      %v992 = vsel %vm283, %v987, %v991
      %v994 = vshrl.u32 %v881, 16
      %v996 = vrot.slane %v994, 4
      %v997 = vshll.u32 %v881, 16
      %v999 = vrot.slane %v997, 5
      %v1000 = vor.u32 %v996, %v999
      %v1001 = vrot.slane %v1000, 4
      %v1003 = vshll.u32 %v882, 16
      %v1005 = vrot.slane %v1003, 5
      %v1006 = vsel %vm283, %v1001, %v1005
      %v1007 = vshrl.u32 %v882, 16
      %v1009 = vrot.slane %v1007, 4
      %v1010 = vor.u32 %v1009, %v1005
      %v1011 = vrot.slane %v1010, 4
      %v1013 = vshll.u32 %v893, 16
      %v1015 = vrot.slane %v1013, 5
      %v1016 = vsel %vm283, %v1011, %v1015
      %v1018 = vshrl.u32 %v883, 16
      %v1020 = vrot.slane %v1018, 4
      %v1021 = vshll.u32 %v883, 16
      %v1023 = vrot.slane %v1021, 5
      %v1024 = vor.u32 %v1020, %v1023
      %v1025 = vrot.slane %v1024, 4
      %v1027 = vshll.u32 %v884, 16
      %v1029 = vrot.slane %v1027, 5
      %v1030 = vsel %vm283, %v1025, %v1029
      %v1031 = vshrl.u32 %v884, 16
      %v1033 = vrot.slane %v1031, 4
      %v1034 = vor.u32 %v1033, %v1029
      %v1035 = vrot.slane %v1034, 4
      %v1037 = vshll.u32 %v894, 16
      %v1039 = vrot.slane %v1037, 5
      %v1040 = vsel %vm283, %v1035, %v1039
      %v1042 = vshrl.u32 %v885, 16
      %v1044 = vrot.slane %v1042, 4
      %v1045 = vshll.u32 %v885, 16
      %v1047 = vrot.slane %v1045, 5
      %v1048 = vor.u32 %v1044, %v1047
      %v1049 = vrot.slane %v1048, 4
      %v1051 = vshll.u32 %v886, 16
      %v1053 = vrot.slane %v1051, 5
      %v1054 = vsel %vm283, %v1049, %v1053
      %v1055 = vshrl.u32 %v886, 16
      %v1057 = vrot.slane %v1055, 4
      %v1058 = vor.u32 %v1057, %v1053
      %v1059 = vrot.slane %v1058, 4
      %v1061 = vshll.u32 %v895, 16
      %v1063 = vrot.slane %v1061, 5
      %v1064 = vsel %vm283, %v1059, %v1063
      %v1066 = vshrl.u32 %v887, 16
      %v1068 = vrot.slane %v1066, 4
      %v1069 = vshll.u32 %v887, 16
      %v1071 = vrot.slane %v1069, 5
      %v1072 = vor.u32 %v1068, %v1071
      %v1073 = vrot.slane %v1072, 4
      %v1075 = vshll.u32 %v888, 16
      %v1077 = vrot.slane %v1075, 5
      %v1078 = vsel %vm283, %v1073, %v1077
      %v1079 = vshrl.u32 %v888, 16
      %v1081 = vrot.slane %v1079, 4
      %v1082 = vor.u32 %v1081, %v1077
      %v1083 = vrot.slane %v1082, 4
      %v1085 = vshll.u32 %v896, 16
      %v1087 = vrot.slane %v1085, 5
      %v1088 = vsel %vm283, %v1083, %v1087
      %v1089 = vld [vmem:[%s872] sm:$0xe]
      %v1090 = vld [vmem:[%s872 + $0xc] sm:$0xe]
      %v1091 = vld [vmem:[%s872 + $0x18] sm:$0xe]
      %v1092 = vld [vmem:[%s872 + $0x24] sm:$0xe]
      %v1093 = vld [vmem:[%s872 + $0x30] sm:$0xe]
      %v1094 = vld [vmem:[%s872 + $0x3c] sm:$0xe]
      %v1095 = vld [vmem:[%s872 + $0x48] sm:$0xe]
      %v1096 = vld [vmem:[%s872 + $0x54] sm:$0xe]
      %v1121 = vrot.slane %v1089, 5
      %v1122 = vrot.slane %v1121, 4
      %v1123 = vrot.slane %v874, 5
      %v1124 = vsel %vm510, %v1122, %v1123
      %v1125 = vrot.slane %v1123, 4
      %v1126 = vrot.slane %v889, 5
      %v1127 = vsel %vm510, %v1125, %v1126
      %v1128 = vrot.slane %v1090, 5
      %v1129 = vrot.slane %v1128, 4
      %v1130 = vrot.slane %v876, 5
      %v1131 = vsel %vm510, %v1129, %v1130
      %v1132 = vrot.slane %v1130, 4
      %v1133 = vrot.slane %v890, 5
      %v1134 = vsel %vm510, %v1132, %v1133
      %v1135 = vrot.slane %v1091, 5
      %v1136 = vrot.slane %v1135, 4
      %v1137 = vrot.slane %v878, 5
      %v1138 = vsel %vm510, %v1136, %v1137
      %v1139 = vrot.slane %v1137, 4
      %v1140 = vrot.slane %v891, 5
      %v1141 = vsel %vm510, %v1139, %v1140
      %v1142 = vrot.slane %v1092, 5
      %v1143 = vrot.slane %v1142, 4
      %v1144 = vrot.slane %v880, 5
      %v1145 = vsel %vm510, %v1143, %v1144
      %v1146 = vrot.slane %v1144, 4
      %v1147 = vrot.slane %v892, 5
      %v1148 = vsel %vm510, %v1146, %v1147
      %v1149 = vrot.slane %v1093, 5
      %v1150 = vrot.slane %v1149, 4
      %v1151 = vrot.slane %v882, 5
      %v1152 = vsel %vm510, %v1150, %v1151
      %v1153 = vrot.slane %v1151, 4
      %v1154 = vrot.slane %v893, 5
      %v1155 = vsel %vm510, %v1153, %v1154
      %v1156 = vrot.slane %v1094, 5
      %v1157 = vrot.slane %v1156, 4
      %v1158 = vrot.slane %v884, 5
      %v1159 = vsel %vm510, %v1157, %v1158
      %v1160 = vrot.slane %v1158, 4
      %v1161 = vrot.slane %v894, 5
      %v1162 = vsel %vm510, %v1160, %v1161
      %v1163 = vrot.slane %v1095, 5
      %v1164 = vrot.slane %v1163, 4
      %v1165 = vrot.slane %v886, 5
      %v1166 = vsel %vm510, %v1164, %v1165
      %v1167 = vrot.slane %v1165, 4
      %v1168 = vrot.slane %v895, 5
      %v1169 = vsel %vm510, %v1167, %v1168
      %v1170 = vrot.slane %v1096, 5
      %v1171 = vrot.slane %v1170, 4
      %v1172 = vrot.slane %v888, 5
      %v1173 = vsel %vm510, %v1171, %v1172
      %v1174 = vrot.slane %v1172, 4
      %v1175 = vrot.slane %v896, 5
      %v1176 = vsel %vm510, %v1174, %v1175
      %v1185 = vunpack.c.l.b16 %v257
      %v1186 = vunpack.c.l.b16 %v258
      %v1187 = vunpack.c.l.b16 %v259
      %v1188 = vunpack.c.l.b16 %v260
      %v1189 = vunpack.c.l.b16 %v261
      %v1190 = vunpack.c.l.b16 %v262
      %v1191 = vunpack.c.l.b16 %v263
      %v1192 = vunpack.c.l.b16 %v264
      %v1193 = vunpack.c.l.b16 %v265
      %v1194 = vunpack.c.l.b16 %v266
      %v1195 = vunpack.c.l.b16 %v267
      %v1196 = vunpack.c.l.b16 %v268
      %v1197 = vunpack.c.l.b16 %v269
      %v1198 = vunpack.c.l.b16 %v270
      %v1199 = vunpack.c.l.b16 %v271
      %v1200 = vunpack.c.l.b16 %v272
      %v1201 = vpack.c.b16 %v1186, %v1185
      %v1202 = vpack.c.b16 %v1188, %v1187
      %v1203 = vpack.c.b16 %v1190, %v1189
      %v1204 = vpack.c.b16 %v1192, %v1191
      %v1205 = vpack.c.b16 %v1194, %v1193
      %v1206 = vpack.c.b16 %v1196, %v1195
      %v1207 = vpack.c.b16 %v1198, %v1197
      %v1208 = vpack.c.b16 %v1200, %v1199
      %v1209 = vunpack.c.l.b16 %v297
      %v1210 = vunpack.c.l.b16 %v307
      %v1211 = vunpack.c.l.b16 %v321
      %v1212 = vunpack.c.l.b16 %v331
      %v1213 = vunpack.c.l.b16 %v345
      %v1214 = vunpack.c.l.b16 %v355
      %v1215 = vunpack.c.l.b16 %v369
      %v1216 = vunpack.c.l.b16 %v379
      %v1217 = vunpack.c.l.b16 %v393
      %v1218 = vunpack.c.l.b16 %v403
      %v1219 = vunpack.c.l.b16 %v417
      %v1220 = vunpack.c.l.b16 %v427
      %v1221 = vunpack.c.l.b16 %v441
      %v1222 = vunpack.c.l.b16 %v451
      %v1223 = vunpack.c.l.b16 %v465
      %v1224 = vunpack.c.l.b16 %v475
      %v1225 = vpack.c.b16 %v1210, %v1209
      %v1226 = vpack.c.b16 %v1212, %v1211
      %v1227 = vpack.c.b16 %v1214, %v1213
      %v1228 = vpack.c.b16 %v1216, %v1215
      %v1229 = vpack.c.b16 %v1218, %v1217
      %v1230 = vpack.c.b16 %v1220, %v1219
      %v1231 = vpack.c.b16 %v1222, %v1221
      %v1232 = vpack.c.b16 %v1224, %v1223
      %1233 = vrot.lane.b32.xlu0 %v1225, 4
      %v1234 = vpop.permute.xlu0 %1233
      %1235 = vrot.lane.b32.xlu0 %v1226, 4
      %v1236 = vpop.permute.xlu0 %1235
      %1237 = vrot.lane.b32.xlu0 %v1227, 4
      %v1238 = vpop.permute.xlu0 %1237
      %1239 = vrot.lane.b32.xlu0 %v1228, 4
      %v1240 = vpop.permute.xlu0 %1239
      %1241 = vrot.lane.b32.xlu0 %v1229, 4
      %v1242 = vpop.permute.xlu0 %1241
      %1243 = vrot.lane.b32.xlu0 %v1230, 4
      %v1244 = vpop.permute.xlu0 %1243
      %1245 = vrot.lane.b32.xlu0 %v1231, 4
      %v1246 = vpop.permute.xlu0 %1245
      %1247 = vrot.lane.b32.xlu0 %v1232, 4
      %v1248 = vpop.permute.xlu0 %1247
      %v1249 = vunpack.c.l.b16 %v514
      %v1250 = vunpack.c.l.b16 %v517
      %v1251 = vunpack.c.l.b16 %v521
      %v1252 = vunpack.c.l.b16 %v524
      %v1253 = vunpack.c.l.b16 %v528
      %v1254 = vunpack.c.l.b16 %v531
      %v1255 = vunpack.c.l.b16 %v535
      %v1256 = vunpack.c.l.b16 %v538
      %v1257 = vunpack.c.l.b16 %v542
      %v1258 = vunpack.c.l.b16 %v545
      %v1259 = vunpack.c.l.b16 %v549
      %v1260 = vunpack.c.l.b16 %v552
      %v1261 = vunpack.c.l.b16 %v556
      %v1262 = vunpack.c.l.b16 %v559
      %v1263 = vunpack.c.l.b16 %v563
      %v1264 = vunpack.c.l.b16 %v566
      %v1265 = vpack.c.b16 %v1250, %v1249
      %v1266 = vpack.c.b16 %v1252, %v1251
      %v1267 = vpack.c.b16 %v1254, %v1253
      %v1268 = vpack.c.b16 %v1256, %v1255
      %v1269 = vpack.c.b16 %v1258, %v1257
      %v1270 = vpack.c.b16 %v1260, %v1259
      %v1271 = vpack.c.b16 %v1262, %v1261
      %v1272 = vpack.c.b16 %v1264, %v1263
      %1273 = vrot.lane.b32.xlu0 %v1265, 8
      %v1274 = vpop.permute.xlu0 %1273
      %1275 = vrot.lane.b32.xlu0 %v1266, 8
      %v1276 = vpop.permute.xlu0 %1275
      %1277 = vrot.lane.b32.xlu0 %v1267, 8
      %v1278 = vpop.permute.xlu0 %1277
      %1279 = vrot.lane.b32.xlu0 %v1268, 8
      %v1280 = vpop.permute.xlu0 %1279
      %1281 = vrot.lane.b32.xlu0 %v1269, 8
      %v1282 = vpop.permute.xlu0 %1281
      %1283 = vrot.lane.b32.xlu0 %v1270, 8
      %v1284 = vpop.permute.xlu0 %1283
      %1285 = vrot.lane.b32.xlu0 %v1271, 8
      %v1286 = vpop.permute.xlu0 %1285
      %1287 = vrot.lane.b32.xlu0 %v1272, 8
      %v1288 = vpop.permute.xlu0 %1287
      %v1297 = vunpack.c.l.b16 %v568
      %v1298 = vunpack.c.l.b16 %v569
      %v1299 = vunpack.c.l.b16 %v570
      %v1300 = vunpack.c.l.b16 %v571
      %v1301 = vunpack.c.l.b16 %v572
      %v1302 = vunpack.c.l.b16 %v573
      %v1303 = vunpack.c.l.b16 %v574
      %v1304 = vunpack.c.l.b16 %v575
      %v1305 = vunpack.c.l.b16 %v576
      %v1306 = vunpack.c.l.b16 %v577
      %v1307 = vunpack.c.l.b16 %v578
      %v1308 = vunpack.c.l.b16 %v579
      %v1309 = vunpack.c.l.b16 %v580
      %v1310 = vunpack.c.l.b16 %v581
      %v1311 = vunpack.c.l.b16 %v582
      %v1312 = vunpack.c.l.b16 %v583
      %v1313 = vpack.c.b16 %v1298, %v1297
      %v1314 = vpack.c.b16 %v1300, %v1299
      %v1315 = vpack.c.b16 %v1302, %v1301
      %v1316 = vpack.c.b16 %v1304, %v1303
      %v1317 = vpack.c.b16 %v1306, %v1305
      %v1318 = vpack.c.b16 %v1308, %v1307
      %v1319 = vpack.c.b16 %v1310, %v1309
      %v1320 = vpack.c.b16 %v1312, %v1311
      %1321 = vrot.lane.b32.xlu0 %v1313, 12
      %v1322 = vpop.permute.xlu0 %1321
      %1323 = vrot.lane.b32.xlu0 %v1314, 12
      %v1324 = vpop.permute.xlu0 %1323
      %1325 = vrot.lane.b32.xlu0 %v1315, 12
      %v1326 = vpop.permute.xlu0 %1325
      %1327 = vrot.lane.b32.xlu0 %v1316, 12
      %v1328 = vpop.permute.xlu0 %1327
      %1329 = vrot.lane.b32.xlu0 %v1317, 12
      %v1330 = vpop.permute.xlu0 %1329
      %1331 = vrot.lane.b32.xlu0 %v1318, 12
      %v1332 = vpop.permute.xlu0 %1331
      %1333 = vrot.lane.b32.xlu0 %v1319, 12
      %v1334 = vpop.permute.xlu0 %1333
      %1335 = vrot.lane.b32.xlu0 %v1320, 12
      %v1336 = vpop.permute.xlu0 %1335
      %v1337 = vunpack.c.l.b16 %v605
      %v1338 = vunpack.c.l.b16 %v615
      %v1339 = vunpack.c.l.b16 %v629
      %v1340 = vunpack.c.l.b16 %v639
      %v1341 = vunpack.c.l.b16 %v653
      %v1342 = vunpack.c.l.b16 %v663
      %v1343 = vunpack.c.l.b16 %v677
      %v1344 = vunpack.c.l.b16 %v687
      %v1345 = vunpack.c.l.b16 %v701
      %v1346 = vunpack.c.l.b16 %v711
      %v1347 = vunpack.c.l.b16 %v725
      %v1348 = vunpack.c.l.b16 %v735
      %v1349 = vunpack.c.l.b16 %v749
      %v1350 = vunpack.c.l.b16 %v759
      %v1351 = vunpack.c.l.b16 %v773
      %v1352 = vunpack.c.l.b16 %v783
      %v1353 = vpack.c.b16 %v1338, %v1337
      %v1354 = vpack.c.b16 %v1340, %v1339
      %v1355 = vpack.c.b16 %v1342, %v1341
      %v1356 = vpack.c.b16 %v1344, %v1343
      %v1357 = vpack.c.b16 %v1346, %v1345
      %v1358 = vpack.c.b16 %v1348, %v1347
      %v1359 = vpack.c.b16 %v1350, %v1349
      %v1360 = vpack.c.b16 %v1352, %v1351
      %1361 = vrot.lane.b32.xlu0 %v1353, 16
      %v1362 = vpop.permute.xlu0 %1361
      %1363 = vrot.lane.b32.xlu0 %v1354, 16
      %v1364 = vpop.permute.xlu0 %1363
      %1365 = vrot.lane.b32.xlu0 %v1355, 16
      %v1366 = vpop.permute.xlu0 %1365
      %1367 = vrot.lane.b32.xlu0 %v1356, 16
      %v1368 = vpop.permute.xlu0 %1367
      %1369 = vrot.lane.b32.xlu0 %v1357, 16
      %v1370 = vpop.permute.xlu0 %1369
      %1371 = vrot.lane.b32.xlu0 %v1358, 16
      %v1372 = vpop.permute.xlu0 %1371
      %1373 = vrot.lane.b32.xlu0 %v1359, 16
      %v1374 = vpop.permute.xlu0 %1373
      %1375 = vrot.lane.b32.xlu0 %v1360, 16
      %v1376 = vpop.permute.xlu0 %1375
      %v1377 = vunpack.c.l.b16 %v819
      %v1378 = vunpack.c.l.b16 %v822
      %v1379 = vunpack.c.l.b16 %v826
      %v1380 = vunpack.c.l.b16 %v829
      %v1381 = vunpack.c.l.b16 %v833
      %v1382 = vunpack.c.l.b16 %v836
      %v1383 = vunpack.c.l.b16 %v840
      %v1384 = vunpack.c.l.b16 %v843
      %v1385 = vunpack.c.l.b16 %v847
      %v1386 = vunpack.c.l.b16 %v850
      %v1387 = vunpack.c.l.b16 %v854
      %v1388 = vunpack.c.l.b16 %v857
      %v1389 = vunpack.c.l.b16 %v861
      %v1390 = vunpack.c.l.b16 %v864
      %v1391 = vunpack.c.l.b16 %v868
      %v1392 = vunpack.c.l.b16 %v871
      %v1393 = vpack.c.b16 %v1378, %v1377
      %v1394 = vpack.c.b16 %v1380, %v1379
      %v1395 = vpack.c.b16 %v1382, %v1381
      %v1396 = vpack.c.b16 %v1384, %v1383
      %v1397 = vpack.c.b16 %v1386, %v1385
      %v1398 = vpack.c.b16 %v1388, %v1387
      %v1399 = vpack.c.b16 %v1390, %v1389
      %v1400 = vpack.c.b16 %v1392, %v1391
      %1401 = vrot.lane.b32.xlu0 %v1393, 20
      %v1402 = vpop.permute.xlu0 %1401
      %1403 = vrot.lane.b32.xlu0 %v1394, 20
      %v1404 = vpop.permute.xlu0 %1403
      %1405 = vrot.lane.b32.xlu0 %v1395, 20
      %v1406 = vpop.permute.xlu0 %1405
      %1407 = vrot.lane.b32.xlu0 %v1396, 20
      %v1408 = vpop.permute.xlu0 %1407
      %1409 = vrot.lane.b32.xlu0 %v1397, 20
      %v1410 = vpop.permute.xlu0 %1409
      %1411 = vrot.lane.b32.xlu0 %v1398, 20
      %v1412 = vpop.permute.xlu0 %1411
      %1413 = vrot.lane.b32.xlu0 %v1399, 20
      %v1414 = vpop.permute.xlu0 %1413
      %1415 = vrot.lane.b32.xlu0 %v1400, 20
      %v1416 = vpop.permute.xlu0 %1415
      %v1425 = vunpack.c.l.b16 %v873
      %v1426 = vunpack.c.l.b16 %v874
      %v1427 = vunpack.c.l.b16 %v875
      %v1428 = vunpack.c.l.b16 %v876
      %v1429 = vunpack.c.l.b16 %v877
      %v1430 = vunpack.c.l.b16 %v878
      %v1431 = vunpack.c.l.b16 %v879
      %v1432 = vunpack.c.l.b16 %v880
      %v1433 = vunpack.c.l.b16 %v881
      %v1434 = vunpack.c.l.b16 %v882
      %v1435 = vunpack.c.l.b16 %v883
      %v1436 = vunpack.c.l.b16 %v884
      %v1437 = vunpack.c.l.b16 %v885
      %v1438 = vunpack.c.l.b16 %v886
      %v1439 = vunpack.c.l.b16 %v887
      %v1440 = vunpack.c.l.b16 %v888
      %v1441 = vpack.c.b16 %v1426, %v1425
      %v1442 = vpack.c.b16 %v1428, %v1427
      %v1443 = vpack.c.b16 %v1430, %v1429
      %v1444 = vpack.c.b16 %v1432, %v1431
      %v1445 = vpack.c.b16 %v1434, %v1433
      %v1446 = vpack.c.b16 %v1436, %v1435
      %v1447 = vpack.c.b16 %v1438, %v1437
      %v1448 = vpack.c.b16 %v1440, %v1439
      %1449 = vrot.lane.b32.xlu0 %v1441, 24
      %v1450 = vpop.permute.xlu0 %1449
      %1451 = vrot.lane.b32.xlu0 %v1442, 24
      %v1452 = vpop.permute.xlu0 %1451
      %1453 = vrot.lane.b32.xlu0 %v1443, 24
      %v1454 = vpop.permute.xlu0 %1453
      %1455 = vrot.lane.b32.xlu0 %v1444, 24
      %v1456 = vpop.permute.xlu0 %1455
      %1457 = vrot.lane.b32.xlu0 %v1445, 24
      %v1458 = vpop.permute.xlu0 %1457
      %1459 = vrot.lane.b32.xlu0 %v1446, 24
      %v1460 = vpop.permute.xlu0 %1459
      %1461 = vrot.lane.b32.xlu0 %v1447, 24
      %v1462 = vpop.permute.xlu0 %1461
      %1463 = vrot.lane.b32.xlu0 %v1448, 24
      %v1464 = vpop.permute.xlu0 %1463
      %v1465 = vunpack.c.l.b16 %v910
      %v1466 = vunpack.c.l.b16 %v920
      %v1467 = vunpack.c.l.b16 %v934
      %v1468 = vunpack.c.l.b16 %v944
      %v1469 = vunpack.c.l.b16 %v958
      %v1470 = vunpack.c.l.b16 %v968
      %v1471 = vunpack.c.l.b16 %v982
      %v1472 = vunpack.c.l.b16 %v992
      %v1473 = vunpack.c.l.b16 %v1006
      %v1474 = vunpack.c.l.b16 %v1016
      %v1475 = vunpack.c.l.b16 %v1030
      %v1476 = vunpack.c.l.b16 %v1040
      %v1477 = vunpack.c.l.b16 %v1054
      %v1478 = vunpack.c.l.b16 %v1064
      %v1479 = vunpack.c.l.b16 %v1078
      %v1480 = vunpack.c.l.b16 %v1088
      %v1481 = vpack.c.b16 %v1466, %v1465
      %v1482 = vpack.c.b16 %v1468, %v1467
      %v1483 = vpack.c.b16 %v1470, %v1469
      %v1484 = vpack.c.b16 %v1472, %v1471
      %v1485 = vpack.c.b16 %v1474, %v1473
      %v1486 = vpack.c.b16 %v1476, %v1475
      %v1487 = vpack.c.b16 %v1478, %v1477
      %v1488 = vpack.c.b16 %v1480, %v1479
      %1489 = vrot.lane.b32.xlu0 %v1481, 28
      %v1490 = vpop.permute.xlu0 %1489
      %1491 = vrot.lane.b32.xlu0 %v1482, 28
      %v1492 = vpop.permute.xlu0 %1491
      %1493 = vrot.lane.b32.xlu0 %v1483, 28
      %v1494 = vpop.permute.xlu0 %1493
      %1495 = vrot.lane.b32.xlu0 %v1484, 28
      %v1496 = vpop.permute.xlu0 %1495
      %1497 = vrot.lane.b32.xlu0 %v1485, 28
      %v1498 = vpop.permute.xlu0 %1497
      %1499 = vrot.lane.b32.xlu0 %v1486, 28
      %v1500 = vpop.permute.xlu0 %1499
      %1501 = vrot.lane.b32.xlu0 %v1487, 28
      %v1502 = vpop.permute.xlu0 %1501
      %1503 = vrot.lane.b32.xlu0 %v1488, 28
      %v1504 = vpop.permute.xlu0 %1503
      %v1505 = vunpack.c.l.b16 %v1124
      %v1506 = vunpack.c.l.b16 %v1127
      %v1507 = vunpack.c.l.b16 %v1131
      %v1508 = vunpack.c.l.b16 %v1134
      %v1509 = vunpack.c.l.b16 %v1138
      %v1510 = vunpack.c.l.b16 %v1141
      %v1511 = vunpack.c.l.b16 %v1145
      %v1512 = vunpack.c.l.b16 %v1148
      %v1513 = vunpack.c.l.b16 %v1152
      %v1514 = vunpack.c.l.b16 %v1155
      %v1515 = vunpack.c.l.b16 %v1159
      %v1516 = vunpack.c.l.b16 %v1162
      %v1517 = vunpack.c.l.b16 %v1166
      %v1518 = vunpack.c.l.b16 %v1169
      %v1519 = vunpack.c.l.b16 %v1173
      %v1520 = vunpack.c.l.b16 %v1176
      %v1521 = vpack.c.b16 %v1506, %v1505
      %v1522 = vpack.c.b16 %v1508, %v1507
      %v1523 = vpack.c.b16 %v1510, %v1509
      %v1524 = vpack.c.b16 %v1512, %v1511
      %v1525 = vpack.c.b16 %v1514, %v1513
      %v1526 = vpack.c.b16 %v1516, %v1515
      %v1527 = vpack.c.b16 %v1518, %v1517
      %v1528 = vpack.c.b16 %v1520, %v1519
      %1529 = vrot.lane.b32.xlu0 %v1521, 32
      %v1530 = vpop.permute.xlu0 %1529
      %1531 = vrot.lane.b32.xlu0 %v1522, 32
      %v1532 = vpop.permute.xlu0 %1531
      %1533 = vrot.lane.b32.xlu0 %v1523, 32
      %v1534 = vpop.permute.xlu0 %1533
      %1535 = vrot.lane.b32.xlu0 %v1524, 32
      %v1536 = vpop.permute.xlu0 %1535
      %1537 = vrot.lane.b32.xlu0 %v1525, 32
      %v1538 = vpop.permute.xlu0 %1537
      %1539 = vrot.lane.b32.xlu0 %v1526, 32
      %v1540 = vpop.permute.xlu0 %1539
      %1541 = vrot.lane.b32.xlu0 %v1527, 32
      %v1542 = vpop.permute.xlu0 %1541
      %1543 = vrot.lane.b32.xlu0 %v1528, 32
      %v1544 = vpop.permute.xlu0 %1543
      %vm1545 = vcmask 31744
      %v1548 = vsel %vm1545, %v1201, %v1234
      %v1551 = vsel %vm1545, %v1202, %v1236
      %v1554 = vsel %vm1545, %v1203, %v1238
      %v1557 = vsel %vm1545, %v1204, %v1240
      %v1560 = vsel %vm1545, %v1205, %v1242
      %v1563 = vsel %vm1545, %v1206, %v1244
      %v1566 = vsel %vm1545, %v1207, %v1246
      %v1569 = vsel %vm1545, %v1208, %v1248
      %vm1570 = vcmask 64512
      %v1572 = vsel %vm1570, %v1548, %v1274
      %v1574 = vsel %vm1570, %v1551, %v1276
      %v1576 = vsel %vm1570, %v1554, %v1278
      %v1578 = vsel %vm1570, %v1557, %v1280
      %v1580 = vsel %vm1570, %v1560, %v1282
      %v1582 = vsel %vm1570, %v1563, %v1284
      %v1584 = vsel %vm1570, %v1566, %v1286
      %v1586 = vsel %vm1570, %v1569, %v1288
      %vm1587 = vcmask 97280
      %v1589 = vsel %vm1587, %v1572, %v1322
      %v1591 = vsel %vm1587, %v1574, %v1324
      %v1593 = vsel %vm1587, %v1576, %v1326
      %v1595 = vsel %vm1587, %v1578, %v1328
      %v1597 = vsel %vm1587, %v1580, %v1330
      %v1599 = vsel %vm1587, %v1582, %v1332
      %v1601 = vsel %vm1587, %v1584, %v1334
      %v1603 = vsel %vm1587, %v1586, %v1336
      %vm1604 = vcmask 130048
      %v1606 = vsel %vm1604, %v1589, %v1362
      %v1608 = vsel %vm1604, %v1591, %v1364
      %v1610 = vsel %vm1604, %v1593, %v1366
      %v1612 = vsel %vm1604, %v1595, %v1368
      %v1614 = vsel %vm1604, %v1597, %v1370
      %v1616 = vsel %vm1604, %v1599, %v1372
      %v1618 = vsel %vm1604, %v1601, %v1374
      %v1620 = vsel %vm1604, %v1603, %v1376
      %vm1621 = vcmask 162816
      %v1623 = vsel %vm1621, %v1606, %v1402
      %v1625 = vsel %vm1621, %v1608, %v1404
      %v1627 = vsel %vm1621, %v1610, %v1406
      %v1629 = vsel %vm1621, %v1612, %v1408
      %v1631 = vsel %vm1621, %v1614, %v1410
      %v1633 = vsel %vm1621, %v1616, %v1412
      %v1635 = vsel %vm1621, %v1618, %v1414
      %v1637 = vsel %vm1621, %v1620, %v1416
      %vm1638 = vcmask 195584
      %v1640 = vsel %vm1638, %v1623, %v1450
      %v1642 = vsel %vm1638, %v1625, %v1452
      %v1644 = vsel %vm1638, %v1627, %v1454
      %v1646 = vsel %vm1638, %v1629, %v1456
      %v1648 = vsel %vm1638, %v1631, %v1458
      %v1650 = vsel %vm1638, %v1633, %v1460
      %v1652 = vsel %vm1638, %v1635, %v1462
      %v1654 = vsel %vm1638, %v1637, %v1464
      %vm1655 = vcmask 228352
      %v1657 = vsel %vm1655, %v1640, %v1490
      %v1659 = vsel %vm1655, %v1642, %v1492
      %v1661 = vsel %vm1655, %v1644, %v1494
      %v1663 = vsel %vm1655, %v1646, %v1496
      %v1665 = vsel %vm1655, %v1648, %v1498
      %v1667 = vsel %vm1655, %v1650, %v1500
      %v1669 = vsel %vm1655, %v1652, %v1502
      %v1671 = vsel %vm1655, %v1654, %v1504
      %vm1672 = vcmask 261120
      %v1674 = vsel %vm1672, %v1657, %v1530
      %v1676 = vsel %vm1672, %v1659, %v1532
      %v1678 = vsel %vm1672, %v1661, %v1534
      %v1680 = vsel %vm1672, %v1663, %v1536
      %v1682 = vsel %vm1672, %v1665, %v1538
      %v1684 = vsel %vm1672, %v1667, %v1540
      %v1686 = vsel %vm1672, %v1669, %v1542
      %v1688 = vsel %vm1672, %v1671, %v1544
      %v1689 = vld [vmem:[%s238] sm:$0xf]
      %v1690 = vld [vmem:[%s238 + $0x4] sm:$0xf]
      %v1691 = vld [vmem:[%s238 + $0x8] sm:$0xf]
      %v1692 = vld [vmem:[%s238 + $0xc] sm:$0xf]
      %v1693 = vld [vmem:[%s238 + $0x10] sm:$0x3]
      %v1694 = vld [vmem:[%s241] sm:$0x1]
      %v1696 = vperm.slane %v1694, 0
      %v1703 = vunpack.c.l.b16 %v1689
      %v1704 = vunpack.c.l.b16 %v1690
      %v1705 = vunpack.c.l.b16 %v1691
      %v1706 = vunpack.c.l.b16 %v1692
      %v1707 = vunpack.c.l.b16 %v1693
      %v1708 = vpack.c.b16 %v1704, %v1703
      %v1709 = vpack.c.b16 %v1706, %v1705
      %v1710 = vpack.c.b16 %v1707, %v1707
      %vm1713 = vcmask 293888
      %v1714 = vsel %vm1713, %v1674, 0
      %v1716 = vsel %vm1713, %v1676, 0
      %v1718 = vsel %vm1713, %v1678, 0
      %v1720 = vsel %vm1713, %v1680, 0
      %v1722 = vsel %vm1713, %v1682, 0
      %v1724 = vsel %vm1713, %v1684, 0
      %v1726 = vsel %vm1713, %v1686, 0
      %v1728 = vsel %vm1713, %v1688, 0
      %vm1730 = vcmask 1041408
      %v1732 = vsel %vm1730, %v1710, 0
      %1734 = vmatpush.bf16.msra.mxu0 0
      %1735 = vmatpush.bf16.msra.mxu0 0
      %1736 = vmatpush.bf16.msra.mxu0 0
      %1737 = vmatpush.bf16.msra.mxu0 0
      %1738 = vmatpush.bf16.msra.mxu0 0
      %1739 = vmatpush.bf16.msra.mxu0 %v1732
      %1740 = vmatpush.bf16.msra.mxu0 %v1709
      %1741 = vmatpush.bf16.msra.mxu0 %v1708
      %1742 = vmatmul.bf16.gmra.mxu0 %v1714
      %v1743 = vpop.f32.mrf.mxu0
      %v1744 = vadd.f32 %v1696, %v1743
      %v1745 = vpop.f32.mrf.mxu0
      %v1746 = vadd.f32 %v1696, %v1745
      %1747 = vmatmul.bf16.gmra.mxu0 %v1716
      %v1748 = vpop.f32.mrf.mxu0
      %v1749 = vadd.f32 %v1696, %v1748
      %v1750 = vpop.f32.mrf.mxu0
      %v1751 = vadd.f32 %v1696, %v1750
      %1752 = vmatmul.bf16.gmra.mxu0 %v1718
      %v1753 = vpop.f32.mrf.mxu0
      %v1754 = vadd.f32 %v1696, %v1753
      %v1755 = vpop.f32.mrf.mxu0
      %v1756 = vadd.f32 %v1696, %v1755
      %1757 = vmatmul.bf16.gmra.mxu0 %v1720
      %v1758 = vpop.f32.mrf.mxu0
      %v1759 = vadd.f32 %v1696, %v1758
      %v1760 = vpop.f32.mrf.mxu0
      %v1761 = vadd.f32 %v1696, %v1760
      %1762 = vmatmul.bf16.gmra.mxu0 %v1722
      %v1763 = vpop.f32.mrf.mxu0
      %v1764 = vadd.f32 %v1696, %v1763
      %v1765 = vpop.f32.mrf.mxu0
      %v1766 = vadd.f32 %v1696, %v1765
      %1767 = vmatmul.bf16.gmra.mxu0 %v1724
      %v1768 = vpop.f32.mrf.mxu0
      %v1769 = vadd.f32 %v1696, %v1768
      %v1770 = vpop.f32.mrf.mxu0
      %v1771 = vadd.f32 %v1696, %v1770
      %1772 = vmatmul.bf16.gmra.mxu0 %v1726
      %v1773 = vpop.f32.mrf.mxu0
      %v1774 = vadd.f32 %v1696, %v1773
      %v1775 = vpop.f32.mrf.mxu0
      %v1776 = vadd.f32 %v1696, %v1775
      %1777 = vmatmul.bf16.gmra.mxu0 %v1728
      %v1778 = vpop.f32.mrf.mxu0
      %v1779 = vadd.f32 %v1696, %v1778
      %v1780 = vpop.f32.mrf.mxu0
      %v1781 = vadd.f32 %v1696, %v1780
      %1782 = vdwg.mxu0
      %v1783 = vmax.f32 %v1744, 0.0
      %v1784 = vmax.f32 %v1746, 0.0
      %v1785 = vmax.f32 %v1749, 0.0
      %v1786 = vmax.f32 %v1751, 0.0
      %v1787 = vmax.f32 %v1754, 0.0
      %v1788 = vmax.f32 %v1756, 0.0
      %v1789 = vmax.f32 %v1759, 0.0
      %v1790 = vmax.f32 %v1761, 0.0
      %v1791 = vmax.f32 %v1764, 0.0
      %v1792 = vmax.f32 %v1766, 0.0
      %v1793 = vmax.f32 %v1769, 0.0
      %v1794 = vmax.f32 %v1771, 0.0
      %v1795 = vmax.f32 %v1774, 0.0
      %v1796 = vmax.f32 %v1776, 0.0
      %v1797 = vmax.f32 %v1779, 0.0
      %v1798 = vmax.f32 %v1781, 0.0
      %v1799 = vpack.c.bf16 %v1783, %v1783
      %v1800 = vpack.c.bf16 %v1784, %v1784
      %v1801 = vpack.c.bf16 %v1785, %v1785
      %v1802 = vpack.c.bf16 %v1786, %v1786
      %v1803 = vpack.c.bf16 %v1787, %v1787
      %v1804 = vpack.c.bf16 %v1788, %v1788
      %v1805 = vpack.c.bf16 %v1789, %v1789
      %v1806 = vpack.c.bf16 %v1790, %v1790
      %v1807 = vpack.c.bf16 %v1791, %v1791
      %v1808 = vpack.c.bf16 %v1792, %v1792
      %v1809 = vpack.c.bf16 %v1793, %v1793
      %v1810 = vpack.c.bf16 %v1794, %v1794
      %v1811 = vpack.c.bf16 %v1795, %v1795
      %v1812 = vpack.c.bf16 %v1796, %v1796
      %v1813 = vpack.c.bf16 %v1797, %v1797
      %v1814 = vpack.c.bf16 %v1798, %v1798
      %1815 = vst [vmem:[%s254] sm:$0xf] %v1799
      %1816 = vst [vmem:[%s254 + $0x4] sm:$0xf] %v1800
      %1817 = vst [vmem:[%s254 + $0x8] sm:$0xf] %v1801
      %1818 = vst [vmem:[%s254 + $0xc] sm:$0xf] %v1802
      %1819 = vst [vmem:[%s254 + $0x10] sm:$0xf] %v1803
      %1820 = vst [vmem:[%s254 + $0x14] sm:$0xf] %v1804
      %1821 = vst [vmem:[%s254 + $0x18] sm:$0xf] %v1805
      %1822 = vst [vmem:[%s254 + $0x1c] sm:$0xf] %v1806
      %1823 = vst [vmem:[%s254 + $0x20] sm:$0xf] %v1807
      %1824 = vst [vmem:[%s254 + $0x24] sm:$0xf] %v1808
      %1825 = vst [vmem:[%s254 + $0x28] sm:$0xf] %v1809
      %1826 = vst [vmem:[%s254 + $0x2c] sm:$0xf] %v1810
      %1827 = vst [vmem:[%s254 + $0x30] sm:$0xf] %v1811
      %1828 = vst [vmem:[%s254 + $0x34] sm:$0xf] %v1812
      %1829 = vst [vmem:[%s254 + $0x38] sm:$0xf] %v1813
      %1830 = vst [vmem:[%s254 + $0x3c] sm:$0xf] %v1814
      %s1831 = smul.u32 8, %s21
      %p1832 = scmp.lt.s32.totalorder %s20, 1
      %s1833 = scalar_select %p1832, %s20, 1
      %p1834 = scmp.lt.s32.totalorder %s1831, 15
      %s1835 = scalar_select %p1834, %s1831, 15
      %p1836 = scmp.lt.s32.totalorder %s19, 0
      %s1837 = scalar_select %p1836, %s19, 0
      %s1838 = smul.addr %s1835, 2
      %s1839 = sadd.s32 %s1837, %s1838
      %s1840 = smul.addr %s1833, 32
      %s1841 = sadd.s32 %s1839, %s1840
      %s1842 = smul.addr %s1841, 4
      %s1843 = scalar_lea.vmem %s3, %s1842
      // Predicated region
      $region33: #{conv_block_forward.1} parent=31 // pred_check
        %p1844 = pneg %p135
      $region34: #{conv_block_forward.1} parent=31 // pred_check_branch
        %1846 = sbr.rel (%p1844) target = $region36
      $region35: #{conv_block_forward.1} parent=31 // pred_region
        %s1847 = smul.u32 8, %s21
      $region36: #{conv_block_forward.1} parent=31 // pred_fallthru
        _
    $region32: #{conv_block_forward.1} parent=5 // pred_fallthru
      _
    %p1848 = scmp.le.s32.totalorder 2, %s9
    // Predicated region
    $region37: #{conv_block_forward.1} parent=5 // pred_check
      %p1849 = pneg %p1848
    $region38: #{conv_block_forward.1} parent=5 // pred_check_branch
      %1851 = sbr.rel (%p1849) target = $region40
    $region39: #{conv_block_forward.1} parent=5 // pred_region
      %s1852 = ssub.s32 %s9, 2
      // Predicated region
      $region41: #{conv_block_forward.1} parent=39 // pred_check
        %p1853 = pneg %p141
      $region42: #{conv_block_forward.1} parent=39 // pred_check_branch
        %1855 = sbr.rel (%p1853) target = $region44
      $region43: #{conv_block_forward.1} parent=39 // pred_region
        %s1856 = smul.u32 8, %s24
        %p1857 = scmp.lt.s32.totalorder %s23, 1
        %s1858 = scalar_select %p1857, %s23, 1
        %p1859 = scmp.lt.s32.totalorder %s1856, 15
        %s1860 = scalar_select %p1859, %s1856, 15
        %p1861 = scmp.lt.s32.totalorder %s22, 0
        %s1862 = scalar_select %p1861, %s22, 0
        %s1863 = smul.addr %s1860, 2
        %s1864 = sadd.s32 %s1862, %s1863
        %s1865 = smul.addr %s1858, 32
        %s1866 = sadd.s32 %s1864, %s1865
        %s1867 = smul.addr %s1866, 4
        %s1868 = scalar_lea.vmem %s3, %s1867
      $region44: #{conv_block_forward.1} parent=39 // pred_fallthru
        _
    $region40: #{conv_block_forward.1} parent=5 // pred_fallthru
      _
  $region6: #{conv_block_forward.1} parent=0 // loop_footer
    %s13 = sadd.s32 1, %s9
  $region7: #{conv_block_forward.1} parent=0 // loop_footer_branch
    %8 = sbr.rel target = $region3
  $region8: #{conv_block_forward.1} parent=0 // loop_exit
    _

</llo_original>
